<compile_context>
chip_gen: v7x
topology: tpu7x:2x2x1
jax: 0.10.0
libtpu: 0.0.40
codegen_flags: <defaults>
</compile_context>

<pallas_src>
import functools

import jax
import jax.numpy as jnp
from jax.experimental import pallas as pl
from jax.experimental.pallas import tpu as pltpu


def _make_decoder_kernel(num_layers, hidden_size, output_weights):
    L, H = num_layers, hidden_size

    def kernel(x_ref, mem_ref, h0_ref, c0_ref, wq_ref, wg_ref, b_ref, *out_refs):
        if output_weights:
            h_out_ref, c_out_ref, attn_out_ref = out_refs
        else:
            h_out_ref, c_out_ref = out_refs

        # Everything is resident in VMEM for the single grid step.
        # NOTE: for bf16 deployments (v6e/v7x) the MXU operands (x/mem/weights)
        # could stay bf16 and rely on preferred_element_type=f32 accumulation;
        # the demo uses f32 inputs so we keep f32 end-to-end here.
        x = x_ref[...].astype(jnp.float32)        # (B, Din)
        mem = mem_ref[...].astype(jnp.float32)    # (B, S, Dm)
        h = h0_ref[...].astype(jnp.float32)       # (B, H)
        c = c0_ref[...].astype(jnp.float32)       # (B, H)

        # Static unroll over layers: L is small and fixed, full LLO visibility.
        for l in range(L):
            wq = wq_ref[l]                        # (H, Dm)
            wg = wg_ref[l]                        # (Din+Dm+H, 4H) fused [Wx; Wc; Whh]
            b = b_ref[l]                          # (1, 4H)

            # --- attention: batched MXU contractions (flash-style, unit query dim) ---
            q = jnp.dot(h, wq, preferred_element_type=jnp.float32)       # (B, Dm)
            q3 = q[:, None, :]                                           # (B, 1, Dm)
            scores = jnp.einsum("bqd,bsd->bqs", q3, mem,
                                preferred_element_type=jnp.float32)      # (B, 1, S)
            scores = scores - jnp.max(scores, axis=-1, keepdims=True)
            e = jnp.exp(scores)
            inv = pl.reciprocal(jnp.sum(e, axis=-1, keepdims=True), approx=True)
            attn3 = e * inv                                              # (B, 1, S)
            context = jnp.einsum("bqs,bsd->bqd", attn3, mem,
                                 preferred_element_type=jnp.float32)[:, 0, :]  # (B, Dm)

            # --- fused LSTM gates: single MXU push with K = Din + Dm + H ---
            cat = jnp.concatenate([x, context, h], axis=-1)              # (B, K)
            gates = jnp.dot(cat, wg, preferred_element_type=jnp.float32) + b  # (B, 4H)

            i_g = jax.nn.sigmoid(gates[:, 0 * H:1 * H])
            f_g = jax.nn.sigmoid(gates[:, 1 * H:2 * H])
            g_g = jnp.tanh(gates[:, 2 * H:3 * H])
            o_g = jax.nn.sigmoid(gates[:, 3 * H:4 * H])

            c = f_g * c + i_g * g_g
            h = o_g * jnp.tanh(c)

            if output_weights:
                # Store into the resident (L,B,S) VMEM output block; HBM writeback
                # happens exactly once at the end of the single grid step.
                attn_out_ref[l] = attn3[:, 0, :]

        h_out_ref[...] = h.astype(h_out_ref.dtype)
        c_out_ref[...] = c.astype(c_out_ref.dtype)

    return kernel


@functools.partial(jax.jit, static_argnames=("output_weights",))
def lstm_attn_decoder(x, memory, hidden, cell, params, output_weights=True):
    """params: dict of stacked per-layer weights (leading axis = num_layers)."""
    wq = params["wq"]                               # (L, H, Dm)
    wx, wc, whh = params["wx"], params["wc"], params["whh"]
    b = params["b"]                                 # (L, 1, 4H)
    L = wq.shape[0]
    B, Din = x.shape
    _, S, Dm = memory.shape
    _, H = hidden.shape

    # Fuse the three gate weight matrices into one stacked operand, matching the
    # in-kernel concat order [x, context, h].
    wg = jnp.concatenate([wx, wc, whh], axis=1)     # (L, Din+Dm+H, 4H)

    kernel = _make_decoder_kernel(L, H, output_weights)

    out_shape = [
        jax.ShapeDtypeStruct((B, H), hidden.dtype),
        jax.ShapeDtypeStruct((B, H), cell.dtype),
    ]
    out_specs = [
        pl.BlockSpec((B, H), lambda i: (0, 0)),
        pl.BlockSpec((B, H), lambda i: (0, 0)),
    ]
    if output_weights:
        out_shape.append(jax.ShapeDtypeStruct((L, B, S), jnp.float32))
        out_specs.append(pl.BlockSpec((L, B, S), lambda i: (0, 0, 0)))

    in_specs = [
        pl.BlockSpec((B, Din), lambda i: (0, 0)),
        pl.BlockSpec((B, S, Dm), lambda i: (0, 0, 0)),
        pl.BlockSpec((B, H), lambda i: (0, 0)),
        pl.BlockSpec((B, H), lambda i: (0, 0)),
        pl.BlockSpec((L, H, Dm), lambda i: (0, 0, 0)),
        pl.BlockSpec((L, Din + Dm + H, 4 * H), lambda i: (0, 0, 0)),
        pl.BlockSpec((L, 1, 4 * H), lambda i: (0, 0, 0)),
    ]

    # TODO(synk): for production-sized S/Dm, tile S on an extra grid axis and set
    # vmem_limit_bytes explicitly so the resident memory block fits v7x's 64 MiB VMEM.
    outs = pl.pallas_call(
        kernel,
        out_shape=tuple(out_shape),
        grid=(1,),  # single grid step: whole recurrence runs in one pipeline stage
        in_specs=in_specs,
        out_specs=tuple(out_specs),
        compiler_params=pltpu.CompilerParams(dimension_semantics=("arbitrary",)),
    )(x, memory, hidden, cell, wq, wg, b)

    if output_weights:
        h_out, c_out, attn_out = outs
        return h_out, c_out, attn_out
    h_out, c_out = outs
    return h_out, c_out, None


def _reference(x, memory, hidden, cell, params):
    """Pure-JAX reference of the same stacked layer semantics."""
    L = params["wq"].shape[0]
    H = hidden.shape[-1]
    h, c = hidden.astype(jnp.float32), cell.astype(jnp.float32)
    weights = []
    for l in range(L):
        wq, wx, wc = params["wq"][l], params["wx"][l], params["wc"][l]
        whh, b = params["whh"][l], params["b"][l]
        q = h @ wq
        scores = jnp.einsum("bd,bsd->bs", q, memory)
        attn = jax.nn.softmax(scores, axis=-1)
        context = jnp.einsum("bs,bsd->bd", attn, memory)
        gates = x @ wx + context @ wc + h @ whh + b
        i_g = jax.nn.sigmoid(gates[:, 0 * H:1 * H])
        f_g = jax.nn.sigmoid(gates[:, 1 * H:2 * H])
        g_g = jnp.tanh(gates[:, 2 * H:3 * H])
        o_g = jax.nn.sigmoid(gates[:, 3 * H:4 * H])
        c = f_g * c + i_g * g_g
        h = o_g * jnp.tanh(c)
        weights.append(attn)
    return h, c, jnp.stack(weights, axis=0)


if __name__ == "__main__":
    B, S, Din, Dm, H, L = 2, 8, 32, 32, 32, 2

    key = jax.random.PRNGKey(0)
    kx, km, kh, kc, k1, k2, k3, k4, k5 = jax.random.split(key, 9)

    x = jax.random.normal(kx, (B, Din), jnp.float32)
    memory = jax.random.normal(km, (B, S, Dm), jnp.float32)
    hidden = jax.random.normal(kh, (B, H), jnp.float32)
    cell = jax.random.normal(kc, (B, H), jnp.float32)

    # One layer's parameters, replicated L times (deepcopy semantics of _get_clones).
    wq = 0.1 * jax.random.normal(k1, (H, Dm), jnp.float32)
    wx = 0.1 * jax.random.normal(k2, (Din, 4 * H), jnp.float32)
    wc = 0.1 * jax.random.normal(k3, (Dm, 4 * H), jnp.float32)
    whh = 0.1 * jax.random.normal(k4, (H, 4 * H), jnp.float32)
    b = 0.1 * jax.random.normal(k5, (1, 4 * H), jnp.float32)
    params = {
        "wq": jnp.tile(wq[None], (L, 1, 1)),
        "wx": jnp.tile(wx[None], (L, 1, 1)),
        "wc": jnp.tile(wc[None], (L, 1, 1)),
        "whh": jnp.tile(whh[None], (L, 1, 1)),
        "b": jnp.tile(b[None], (L, 1, 1)),
    }

    h_out, c_out, w_out = lstm_attn_decoder(x, memory, hidden, cell, params,
                                            output_weights=True)
    jax.block_until_ready((h_out, c_out, w_out))

    h_ref, c_ref, w_ref = _reference(x, memory, hidden, cell, params)
    # Tolerances account for the EUP approximate reciprocal in the softmax.
    assert jnp.allclose(h_out, h_ref, atol=5e-3, rtol=5e-3)
    assert jnp.allclose(c_out, c_ref, atol=5e-3, rtol=5e-3)
    assert jnp.allclose(w_out, w_ref, atol=5e-3, rtol=5e-3)

    # output_weights=False path: no attn output allocation / stores at all.
    h2, c2, w2 = lstm_attn_decoder(x, memory, hidden, cell, params,
                                   output_weights=False)
    jax.block_until_ready((h2, c2))
    assert w2 is None
    assert jnp.allclose(h2, h_ref, atol=5e-3, rtol=5e-3)
    assert jnp.allclose(c2, c_ref, atol=5e-3, rtol=5e-3)

    print("KERNEL_OK")
</pallas_src>

<mosaic_0001>
module attributes {stable_mosaic.version = 11 : i64} {
  func.func @kernel(%arg0: i32, %arg1: memref<2x32xf32, #tpu.memory_space<vmem>>, %arg2: memref<2x8x32xf32, #tpu.memory_space<vmem>>, %arg3: memref<2x32xf32, #tpu.memory_space<vmem>>, %arg4: memref<2x32xf32, #tpu.memory_space<vmem>>, %arg5: memref<2x32x32xf32, #tpu.memory_space<vmem>>, %arg6: memref<2x96x128xf32, #tpu.memory_space<vmem>>, %arg7: memref<2x1x128xf32, #tpu.memory_space<vmem>>, %arg8: memref<2x32xf32, #tpu.memory_space<vmem>>, %arg9: memref<2x32xf32, #tpu.memory_space<vmem>>, %arg10: memref<2x2x8xf32, #tpu.memory_space<vmem>>) attributes {dimension_semantics = [#tpu.dimension_semantics<arbitrary>], iteration_bounds = array<i64: 1>, scalar_prefetch = 0 : i64, scratch_operands = 0 : i64, tpu.core_type = #tpu.core_type<tc>, window_params = [{pipeline_mode = #tpu.pipeline_mode<synchronous>, transform_indices = @transform_0, window_bounds = array<i64: 2, 32>}, {pipeline_mode = #tpu.pipeline_mode<synchronous>, transform_indices = @transform_1, window_bounds = array<i64: 2, 8, 32>}, {pipeline_mode = #tpu.pipeline_mode<synchronous>, transform_indices = @transform_2, window_bounds = array<i64: 2, 32>}, {pipeline_mode = #tpu.pipeline_mode<synchronous>, transform_indices = @transform_3, window_bounds = array<i64: 2, 32>}, {pipeline_mode = #tpu.pipeline_mode<synchronous>, transform_indices = @transform_4, window_bounds = array<i64: 2, 32, 32>}, {pipeline_mode = #tpu.pipeline_mode<synchronous>, transform_indices = @transform_5, window_bounds = array<i64: 2, 96, 128>}, {pipeline_mode = #tpu.pipeline_mode<synchronous>, transform_indices = @transform_6, window_bounds = array<i64: 2, 1, 128>}, {pipeline_mode = #tpu.pipeline_mode<synchronous>, transform_indices = @transform_7, window_bounds = array<i64: 2, 32>}, {pipeline_mode = #tpu.pipeline_mode<synchronous>, transform_indices = @transform_8, window_bounds = array<i64: 2, 32>}, {pipeline_mode = #tpu.pipeline_mode<synchronous>, transform_indices = @transform_9, window_bounds = array<i64: 2, 2, 8>}]} {
    %c0 = arith.constant 0 : index
    %c0_0 = arith.constant 0 : index
    %0 = vector.load %arg1[%c0, %c0_0] : memref<2x32xf32, #tpu.memory_space<vmem>>, vector<2x32xf32>
    %c0_1 = arith.constant 0 : index
    %c0_2 = arith.constant 0 : index
    %c0_3 = arith.constant 0 : index
    %1 = vector.load %arg2[%c0_1, %c0_2, %c0_3] : memref<2x8x32xf32, #tpu.memory_space<vmem>>, vector<2x8x32xf32>
    %c0_4 = arith.constant 0 : index
    %c0_5 = arith.constant 0 : index
    %2 = vector.load %arg3[%c0_4, %c0_5] : memref<2x32xf32, #tpu.memory_space<vmem>>, vector<2x32xf32>
    %c0_6 = arith.constant 0 : index
    %c0_7 = arith.constant 0 : index
    %3 = vector.load %arg4[%c0_6, %c0_7] : memref<2x32xf32, #tpu.memory_space<vmem>>, vector<2x32xf32>
    %c0_8 = arith.constant 0 : index
    %c0_9 = arith.constant 0 : index
    %c0_10 = arith.constant 0 : index
    %4 = vector.load %arg5[%c0_8, %c0_9, %c0_10] : memref<2x32x32xf32, #tpu.memory_space<vmem>>, vector<1x32x32xf32>
    %5 = vector.shape_cast %4 : vector<1x32x32xf32> to vector<32x32xf32>
    %c0_11 = arith.constant 0 : index
    %c0_12 = arith.constant 0 : index
    %c0_13 = arith.constant 0 : index
    %6 = vector.load %arg6[%c0_11, %c0_12, %c0_13] : memref<2x96x128xf32, #tpu.memory_space<vmem>>, vector<1x96x128xf32>
    %7 = vector.shape_cast %6 : vector<1x96x128xf32> to vector<96x128xf32>
    %c0_14 = arith.constant 0 : index
    %c0_15 = arith.constant 0 : index
    %c0_16 = arith.constant 0 : index
    %8 = vector.load %arg7[%c0_14, %c0_15, %c0_16] : memref<2x1x128xf32, #tpu.memory_space<vmem>>, vector<1x1x128xf32>
    %9 = vector.shape_cast %8 : vector<1x1x128xf32> to vector<1x128xf32>
    %cst = arith.constant dense<0.000000e+00> : vector<2x32xf32>
    %10 = tpu.matmul %2, %5, %cst {dimension_numbers = #tpu.dot_dimension_numbers<[1], [0], [0], [1], [0, 0, 1, 1], [], []>} : vector<2x32xf32>, vector<32x32xf32>, vector<2x32xf32> -> vector<2x32xf32>
    %11 = vector.shape_cast %10 : vector<2x32xf32> to vector<2x1x32xf32>
    "tpu.trace_start"() <{level = 10 : i32, message = "bqd,bsd->bqs"}> : () -> ()
    %cst_17 = arith.constant dense<0.000000e+00> : vector<2x1x8xf32>
    %12 = tpu.matmul %11, %1, %cst_17 {dimension_numbers = #tpu.dot_dimension_numbers<[2], [2], [1], [1], [0, 0, 0, 1, 1, 1], [0], [0]>} : vector<2x1x32xf32>, vector<2x8x32xf32>, vector<2x1x8xf32> -> vector<2x1x8xf32>
    "tpu.trace_stop"() : () -> ()
    %cst_18 = arith.constant dense<0xFF800000> : vector<2x1xf32>
    %13 = vector.multi_reduction <maximumf>, %12, %cst_18 [2] : vector<2x1x8xf32> to vector<2x1xf32>
    %14 = vector.shape_cast %13 : vector<2x1xf32> to vector<2x1x1xf32>
    %15 = vector.broadcast %14 : vector<2x1x1xf32> to vector<2x1x8xf32>
    %16 = arith.subf %12, %15 : vector<2x1x8xf32>
    %17 = math.exp %16 : vector<2x1x8xf32>
    %cst_19 = arith.constant dense<0.000000e+00> : vector<2x1xf32>
    %18 = vector.multi_reduction <add>, %17, %cst_19 [2] : vector<2x1x8xf32> to vector<2x1xf32>
    %19 = vector.shape_cast %18 : vector<2x1xf32> to vector<2x1x1xf32>
    %20 = tpu.reciprocal %19 {approx = true} : vector<2x1x1xf32> -> vector<2x1x1xf32>
    %21 = vector.broadcast %20 : vector<2x1x1xf32> to vector<2x1x8xf32>
    %22 = arith.mulf %17, %21 : vector<2x1x8xf32>
    "tpu.trace_start"() <{level = 10 : i32, message = "bqs,bsd->bqd"}> : () -> ()
    %cst_20 = arith.constant dense<0.000000e+00> : vector<2x1x32xf32>
    %23 = tpu.matmul %22, %1, %cst_20 {dimension_numbers = #tpu.dot_dimension_numbers<[2], [1], [1], [2], [0, 0, 0, 1, 1, 2], [0], [0]>} : vector<2x1x8xf32>, vector<2x8x32xf32>, vector<2x1x32xf32> -> vector<2x1x32xf32>
    "tpu.trace_stop"() : () -> ()
    %24 = vector.shape_cast %23 : vector<2x1x32xf32> to vector<2x32xf32>
    %25 = tpu.concatenate %0, %24, %2 in 1 : vector<2x32xf32>, vector<2x32xf32>, vector<2x32xf32> -> vector<2x96xf32>
    %cst_21 = arith.constant dense<0.000000e+00> : vector<2x128xf32>
    %26 = tpu.matmul %25, %7, %cst_21 {dimension_numbers = #tpu.dot_dimension_numbers<[1], [0], [0], [1], [0, 0, 1, 1], [], []>} : vector<2x96xf32>, vector<96x128xf32>, vector<2x128xf32> -> vector<2x128xf32>
    %27 = vector.broadcast %9 : vector<1x128xf32> to vector<2x128xf32>
    %28 = arith.addf %26, %27 : vector<2x128xf32>
    %29 = vector.extract_strided_slice %28 {offsets = [0, 0], sizes = [2, 32], strides = [1, 1]} : vector<2x128xf32> to vector<2x32xf32>
    %30 = arith.negf %29 : vector<2x32xf32>
    %31 = math.exp %30 : vector<2x32xf32>
    %cst_22 = arith.constant 1.000000e+00 : f32
    %32 = vector.broadcast %cst_22 : f32 to vector<2x32xf32>
    %33 = arith.addf %32, %31 : vector<2x32xf32>
    %34 = arith.divf %32, %33 : vector<2x32xf32>
    %35 = vector.extract_strided_slice %28 {offsets = [0, 32], sizes = [2, 32], strides = [1, 1]} : vector<2x128xf32> to vector<2x32xf32>
    %36 = arith.negf %35 : vector<2x32xf32>
    %37 = math.exp %36 : vector<2x32xf32>
    %cst_23 = arith.constant 1.000000e+00 : f32
    %38 = vector.broadcast %cst_23 : f32 to vector<2x32xf32>
    %39 = arith.addf %38, %37 : vector<2x32xf32>
    %40 = arith.divf %38, %39 : vector<2x32xf32>
    %41 = vector.extract_strided_slice %28 {offsets = [0, 64], sizes = [2, 32], strides = [1, 1]} : vector<2x128xf32> to vector<2x32xf32>
    %42 = math.tanh %41 : vector<2x32xf32>
    %43 = vector.extract_strided_slice %28 {offsets = [0, 96], sizes = [2, 32], strides = [1, 1]} : vector<2x128xf32> to vector<2x32xf32>
    %44 = arith.negf %43 : vector<2x32xf32>
    %45 = math.exp %44 : vector<2x32xf32>
    %cst_24 = arith.constant 1.000000e+00 : f32
    %46 = vector.broadcast %cst_24 : f32 to vector<2x32xf32>
    %47 = arith.addf %46, %45 : vector<2x32xf32>
    %48 = arith.divf %46, %47 : vector<2x32xf32>
    %49 = arith.mulf %40, %3 : vector<2x32xf32>
    %50 = arith.mulf %34, %42 : vector<2x32xf32>
    %51 = arith.addf %49, %50 : vector<2x32xf32>
    %52 = math.tanh %51 : vector<2x32xf32>
    %53 = arith.mulf %48, %52 : vector<2x32xf32>
    %54 = vector.shape_cast %22 : vector<2x1x8xf32> to vector<2x8xf32>
    %c0_25 = arith.constant 0 : index
    %c0_26 = arith.constant 0 : index
    %c0_27 = arith.constant 0 : index
    %55 = vector.load %arg10[%c0_25, %c0_26, %c0_27] : memref<2x2x8xf32, #tpu.memory_space<vmem>>, vector<1x2x8xf32>
    %56 = vector.shape_cast %55 : vector<1x2x8xf32> to vector<2x8xf32>
    %57 = vector.shape_cast %54 : vector<2x8xf32> to vector<1x2x8xf32>
    tpu.vector_store %arg10[%c0_25, %c0_26, %c0_27], %57 {strides = array<i32>} : memref<2x2x8xf32, #tpu.memory_space<vmem>>, vector<1x2x8xf32>,
    %c1 = arith.constant 1 : index
    %c0_28 = arith.constant 0 : index
    %c0_29 = arith.constant 0 : index
    %58 = vector.load %arg5[%c1, %c0_28, %c0_29] : memref<2x32x32xf32, #tpu.memory_space<vmem>>, vector<1x32x32xf32>
    %59 = vector.shape_cast %58 : vector<1x32x32xf32> to vector<32x32xf32>
    %c1_30 = arith.constant 1 : index
    %c0_31 = arith.constant 0 : index
    %c0_32 = arith.constant 0 : index
    %60 = vector.load %arg6[%c1_30, %c0_31, %c0_32] : memref<2x96x128xf32, #tpu.memory_space<vmem>>, vector<1x96x128xf32>
    %61 = vector.shape_cast %60 : vector<1x96x128xf32> to vector<96x128xf32>
    %c1_33 = arith.constant 1 : index
    %c0_34 = arith.constant 0 : index
    %c0_35 = arith.constant 0 : index
    %62 = vector.load %arg7[%c1_33, %c0_34, %c0_35] : memref<2x1x128xf32, #tpu.memory_space<vmem>>, vector<1x1x128xf32>
    %63 = vector.shape_cast %62 : vector<1x1x128xf32> to vector<1x128xf32>
    %cst_36 = arith.constant dense<0.000000e+00> : vector<2x32xf32>
    %64 = tpu.matmul %53, %59, %cst_36 {dimension_numbers = #tpu.dot_dimension_numbers<[1], [0], [0], [1], [0, 0, 1, 1], [], []>} : vector<2x32xf32>, vector<32x32xf32>, vector<2x32xf32> -> vector<2x32xf32>
    %65 = vector.shape_cast %64 : vector<2x32xf32> to vector<2x1x32xf32>
    "tpu.trace_start"() <{level = 10 : i32, message = "bqd,bsd->bqs"}> : () -> ()
    %cst_37 = arith.constant dense<0.000000e+00> : vector<2x1x8xf32>
    %66 = tpu.matmul %65, %1, %cst_37 {dimension_numbers = #tpu.dot_dimension_numbers<[2], [2], [1], [1], [0, 0, 0, 1, 1, 1], [0], [0]>} : vector<2x1x32xf32>, vector<2x8x32xf32>, vector<2x1x8xf32> -> vector<2x1x8xf32>
    "tpu.trace_stop"() : () -> ()
    %cst_38 = arith.constant dense<0xFF800000> : vector<2x1xf32>
    %67 = vector.multi_reduction <maximumf>, %66, %cst_38 [2] : vector<2x1x8xf32> to vector<2x1xf32>
    %68 = vector.shape_cast %67 : vector<2x1xf32> to vector<2x1x1xf32>
    %69 = vector.broadcast %68 : vector<2x1x1xf32> to vector<2x1x8xf32>
    %70 = arith.subf %66, %69 : vector<2x1x8xf32>
    %71 = math.exp %70 : vector<2x1x8xf32>
    %cst_39 = arith.constant dense<0.000000e+00> : vector<2x1xf32>
    %72 = vector.multi_reduction <add>, %71, %cst_39 [2] : vector<2x1x8xf32> to vector<2x1xf32>
    %73 = vector.shape_cast %72 : vector<2x1xf32> to vector<2x1x1xf32>
    %74 = tpu.reciprocal %73 {approx = true} : vector<2x1x1xf32> -> vector<2x1x1xf32>
    %75 = vector.broadcast %74 : vector<2x1x1xf32> to vector<2x1x8xf32>
    %76 = arith.mulf %71, %75 : vector<2x1x8xf32>
    "tpu.trace_start"() <{level = 10 : i32, message = "bqs,bsd->bqd"}> : () -> ()
    %cst_40 = arith.constant dense<0.000000e+00> : vector<2x1x32xf32>
    %77 = tpu.matmul %76, %1, %cst_40 {dimension_numbers = #tpu.dot_dimension_numbers<[2], [1], [1], [2], [0, 0, 0, 1, 1, 2], [0], [0]>} : vector<2x1x8xf32>, vector<2x8x32xf32>, vector<2x1x32xf32> -> vector<2x1x32xf32>
    "tpu.trace_stop"() : () -> ()
    %78 = vector.shape_cast %77 : vector<2x1x32xf32> to vector<2x32xf32>
    %79 = tpu.concatenate %0, %78, %53 in 1 : vector<2x32xf32>, vector<2x32xf32>, vector<2x32xf32> -> vector<2x96xf32>
    %cst_41 = arith.constant dense<0.000000e+00> : vector<2x128xf32>
    %80 = tpu.matmul %79, %61, %cst_41 {dimension_numbers = #tpu.dot_dimension_numbers<[1], [0], [0], [1], [0, 0, 1, 1], [], []>} : vector<2x96xf32>, vector<96x128xf32>, vector<2x128xf32> -> vector<2x128xf32>
    %81 = vector.broadcast %63 : vector<1x128xf32> to vector<2x128xf32>
    %82 = arith.addf %80, %81 : vector<2x128xf32>
    %83 = vector.extract_strided_slice %82 {offsets = [0, 0], sizes = [2, 32], strides = [1, 1]} : vector<2x128xf32> to vector<2x32xf32>
    %84 = arith.negf %83 : vector<2x32xf32>
    %85 = math.exp %84 : vector<2x32xf32>
    %cst_42 = arith.constant 1.000000e+00 : f32
    %86 = vector.broadcast %cst_42 : f32 to vector<2x32xf32>
    %87 = arith.addf %86, %85 : vector<2x32xf32>
    %88 = arith.divf %86, %87 : vector<2x32xf32>
    %89 = vector.extract_strided_slice %82 {offsets = [0, 32], sizes = [2, 32], strides = [1, 1]} : vector<2x128xf32> to vector<2x32xf32>
    %90 = arith.negf %89 : vector<2x32xf32>
    %91 = math.exp %90 : vector<2x32xf32>
    %cst_43 = arith.constant 1.000000e+00 : f32
    %92 = vector.broadcast %cst_43 : f32 to vector<2x32xf32>
    %93 = arith.addf %92, %91 : vector<2x32xf32>
    %94 = arith.divf %92, %93 : vector<2x32xf32>
    %95 = vector.extract_strided_slice %82 {offsets = [0, 64], sizes = [2, 32], strides = [1, 1]} : vector<2x128xf32> to vector<2x32xf32>
    %96 = math.tanh %95 : vector<2x32xf32>
    %97 = vector.extract_strided_slice %82 {offsets = [0, 96], sizes = [2, 32], strides = [1, 1]} : vector<2x128xf32> to vector<2x32xf32>
    %98 = arith.negf %97 : vector<2x32xf32>
    %99 = math.exp %98 : vector<2x32xf32>
    %cst_44 = arith.constant 1.000000e+00 : f32
    %100 = vector.broadcast %cst_44 : f32 to vector<2x32xf32>
    %101 = arith.addf %100, %99 : vector<2x32xf32>
    %102 = arith.divf %100, %101 : vector<2x32xf32>
    %103 = arith.mulf %94, %51 : vector<2x32xf32>
    %104 = arith.mulf %88, %96 : vector<2x32xf32>
    %105 = arith.addf %103, %104 : vector<2x32xf32>
    %106 = math.tanh %105 : vector<2x32xf32>
    %107 = arith.mulf %102, %106 : vector<2x32xf32>
    %108 = vector.shape_cast %76 : vector<2x1x8xf32> to vector<2x8xf32>
    %c1_45 = arith.constant 1 : index
    %c0_46 = arith.constant 0 : index
    %c0_47 = arith.constant 0 : index
    %109 = vector.load %arg10[%c1_45, %c0_46, %c0_47] : memref<2x2x8xf32, #tpu.memory_space<vmem>>, vector<1x2x8xf32>
    %110 = vector.shape_cast %109 : vector<1x2x8xf32> to vector<2x8xf32>
    %111 = vector.shape_cast %108 : vector<2x8xf32> to vector<1x2x8xf32>
    tpu.vector_store %arg10[%c1_45, %c0_46, %c0_47], %111 {strides = array<i32>} : memref<2x2x8xf32, #tpu.memory_space<vmem>>, vector<1x2x8xf32>,
    %c0_48 = arith.constant 0 : index
    %c0_49 = arith.constant 0 : index
    %112 = vector.load %arg8[%c0_48, %c0_49] : memref<2x32xf32, #tpu.memory_space<vmem>>, vector<2x32xf32>
    tpu.vector_store %arg8[%c0_48, %c0_49], %107 {strides = array<i32>} : memref<2x32xf32, #tpu.memory_space<vmem>>, vector<2x32xf32>,
    %c0_50 = arith.constant 0 : index
    %c0_51 = arith.constant 0 : index
    %113 = vector.load %arg9[%c0_50, %c0_51] : memref<2x32xf32, #tpu.memory_space<vmem>>, vector<2x32xf32>
    tpu.vector_store %arg9[%c0_50, %c0_51], %105 {strides = array<i32>} : memref<2x32xf32, #tpu.memory_space<vmem>>, vector<2x32xf32>,
    return
  }
  func.func @transform_0(%arg0: i32) -> (i32, i32) {
    %c0_i32 = arith.constant 0 : i32
    %c0_i32_0 = arith.constant 0 : i32
    %c0_i32_1 = arith.constant 0 : i32
    return %c0_i32, %c0_i32_0 : i32, i32
  }
  func.func @transform_1(%arg0: i32) -> (i32, i32, i32) {
    %c0_i32 = arith.constant 0 : i32
    %c0_i32_0 = arith.constant 0 : i32
    %c0_i32_1 = arith.constant 0 : i32
    %c0_i32_2 = arith.constant 0 : i32
    return %c0_i32, %c0_i32_0, %c0_i32_1 : i32, i32, i32
  }
  func.func @transform_2(%arg0: i32) -> (i32, i32) {
    %c0_i32 = arith.constant 0 : i32
    %c0_i32_0 = arith.constant 0 : i32
    %c0_i32_1 = arith.constant 0 : i32
    return %c0_i32, %c0_i32_0 : i32, i32
  }
  func.func @transform_3(%arg0: i32) -> (i32, i32) {
    %c0_i32 = arith.constant 0 : i32
    %c0_i32_0 = arith.constant 0 : i32
    %c0_i32_1 = arith.constant 0 : i32
    return %c0_i32, %c0_i32_0 : i32, i32
  }
  func.func @transform_4(%arg0: i32) -> (i32, i32, i32) {
    %c0_i32 = arith.constant 0 : i32
    %c0_i32_0 = arith.constant 0 : i32
    %c0_i32_1 = arith.constant 0 : i32
    %c0_i32_2 = arith.constant 0 : i32
    return %c0_i32, %c0_i32_0, %c0_i32_1 : i32, i32, i32
  }
  func.func @transform_5(%arg0: i32) -> (i32, i32, i32) {
    %c0_i32 = arith.constant 0 : i32
    %c0_i32_0 = arith.constant 0 : i32
    %c0_i32_1 = arith.constant 0 : i32
    %c0_i32_2 = arith.constant 0 : i32
    return %c0_i32, %c0_i32_0, %c0_i32_1 : i32, i32, i32
  }
  func.func @transform_6(%arg0: i32) -> (i32, i32, i32) {
    %c0_i32 = arith.constant 0 : i32
    %c0_i32_0 = arith.constant 0 : i32
    %c0_i32_1 = arith.constant 0 : i32
    %c0_i32_2 = arith.constant 0 : i32
    return %c0_i32, %c0_i32_0, %c0_i32_1 : i32, i32, i32
  }
  func.func @transform_7(%arg0: i32) -> (i32, i32) {
    %c0_i32 = arith.constant 0 : i32
    %c0_i32_0 = arith.constant 0 : i32
    %c0_i32_1 = arith.constant 0 : i32
    return %c0_i32, %c0_i32_0 : i32, i32
  }
  func.func @transform_8(%arg0: i32) -> (i32, i32) {
    %c0_i32 = arith.constant 0 : i32
    %c0_i32_0 = arith.constant 0 : i32
    %c0_i32_1 = arith.constant 0 : i32
    return %c0_i32, %c0_i32_0 : i32, i32
  }
  func.func @transform_9(%arg0: i32) -> (i32, i32, i32) {
    %c0_i32 = arith.constant 0 : i32
    %c0_i32_0 = arith.constant 0 : i32
    %c0_i32_1 = arith.constant 0 : i32
    %c0_i32_2 = arith.constant 0 : i32
    return %c0_i32, %c0_i32_0, %c0_i32_1 : i32, i32, i32
  }
}

</mosaic_0001>

<llo_original>
// kernel: lstm_attn_decoder.1
$region0: #{lstm_attn_decoder.1}
  #allocation0 [shape = 'u32[]', space=smem, size = 0x4, offset = 0x4, fixed_abs, tag = 'smem constant byte address 0x4 - core index']
  #allocation1 [shape = 'u32[144,128]{1,0:T(1,128)}', space=vmem, size = 0x12000, scoped, tag = 'internal scratch']
  %s0 = inlined_call_operand.vmem [shape: f32[2,32], index: 0, kind: input, shape index: {}]
  %s1 = inlined_call_operand.vmem [shape: f32[2,8,32], index: 1, kind: input, shape index: {}]
  %s2 = inlined_call_operand.vmem [shape: f32[2,32], index: 2, kind: input, shape index: {}]
  %s3 = inlined_call_operand.vmem [shape: f32[2,32], index: 3, kind: input, shape index: {}]
  %s4 = inlined_call_operand.vmem [shape: f32[2,32,32], index: 4, kind: input, shape index: {}]
  %s5 = inlined_call_operand.vmem [shape: f32[2,96,128], index: 5, kind: input, shape index: {}]
  %s6 = inlined_call_operand.vmem [shape: f32[2,1,128], index: 6, kind: input, shape index: {}]
  %s7 = inlined_call_operand.hbm [shape: f32[2,32], index: 7, kind: output, shape index: {0}]
  %s8 = inlined_call_operand.hbm [shape: f32[2,32], index: 8, kind: output, shape index: {1}]
  %s9 = inlined_call_operand.hbm [shape: f32[2,2,8], index: 9, kind: output, shape index: {2}]
  %10 = xla_tuple %s7, %s8, %s9
  %s11 = sld [smem:[#allocation0]]
  $region54: #{lstm_attn_decoder.1} parent=0
    _
  %s13 = ssub.s32 1, %s11
  %s14 = scalar_select 0, %s13, %s11
  $region1: #{lstm_attn_decoder.1} parent=0
    #allocation2 [shape = 'u8[1024]{0}', space=vmem, size = 0x400, scoped, tag = 'output window, operand 0, single buffered']
    #allocation3 [shape = 's32[1]{0}', space=sflag, size = 0x4, scoped, tag = 'scoped memory for lstm_attn_decoder.1']
    #allocation4 [shape = 'u8[1024]{0}', space=vmem, size = 0x400, scoped, tag = 'output window, operand 1, single buffered']
    #allocation5 [shape = 's32[1]{0}', space=sflag, size = 0x4, scoped, tag = 'scoped memory for lstm_attn_decoder.1']
    #allocation6 [shape = 'u8[2048]{0}', space=vmem, size = 0x800, scoped, tag = 'output window, operand 2, single buffered']
    %15 = vsyncpa [#allocation3], 0
    %16 = vsyncpa [#allocation5], 0
    // Predicated region
    $region2: #{lstm_attn_decoder.1} parent=1 // pred_check
      _
    $region3: #{lstm_attn_decoder.1} parent=1 // pred_check_branch
      %18 = sbr.rel (0) target = $region5
    $region4: #{lstm_attn_decoder.1} parent=1 // pred_region
      _
    $region5: #{lstm_attn_decoder.1} parent=1 // pred_fallthru
      _
    // Predicated region
    $region6: #{lstm_attn_decoder.1} parent=1 // pred_check
      _
    $region7: #{lstm_attn_decoder.1} parent=1 // pred_check_branch
      %20 = sbr.rel (0) target = $region9
    $region8: #{lstm_attn_decoder.1} parent=1 // pred_region
      _
    $region9: #{lstm_attn_decoder.1} parent=1 // pred_fallthru
      _
    // Predicated region
    $region10: #{lstm_attn_decoder.1} parent=1 // pred_check
      _
    $region11: #{lstm_attn_decoder.1} parent=1 // pred_check_branch
      %22 = sbr.rel (0) target = $region13
    $region12: #{lstm_attn_decoder.1} parent=1 // pred_region
      _
    $region13: #{lstm_attn_decoder.1} parent=1 // pred_fallthru
      _
    // Predicated region
    $region14: #{lstm_attn_decoder.1} parent=1 // pred_check
      _
    $region15: #{lstm_attn_decoder.1} parent=1 // pred_check_branch
      %24 = sbr.rel (0) target = $region17
    $region16: #{lstm_attn_decoder.1} parent=1 // pred_region
      _
    $region17: #{lstm_attn_decoder.1} parent=1 // pred_fallthru
      _
    // Predicated region
    $region18: #{lstm_attn_decoder.1} parent=1 // pred_check
      _
    $region19: #{lstm_attn_decoder.1} parent=1 // pred_check_branch
      %26 = sbr.rel (0) target = $region21
    $region20: #{lstm_attn_decoder.1} parent=1 // pred_region
      _
    $region21: #{lstm_attn_decoder.1} parent=1 // pred_fallthru
      _
    // Predicated region
    $region22: #{lstm_attn_decoder.1} parent=1 // pred_check
      _
    $region23: #{lstm_attn_decoder.1} parent=1 // pred_check_branch
      %28 = sbr.rel (0) target = $region25
    $region24: #{lstm_attn_decoder.1} parent=1 // pred_region
      _
    $region25: #{lstm_attn_decoder.1} parent=1 // pred_fallthru
      _
    // Predicated region
    $region26: #{lstm_attn_decoder.1} parent=1 // pred_check
      _
    $region27: #{lstm_attn_decoder.1} parent=1 // pred_check_branch
      %30 = sbr.rel (0) target = $region29
    $region28: #{lstm_attn_decoder.1} parent=1 // pred_region
      _
    $region29: #{lstm_attn_decoder.1} parent=1 // pred_fallthru
      _
    %v31 = vld [vmem:[%s0] sm:$0x3]
    %v32 = vld [vmem:[%s1] sm:$0xff]
    %v33 = vld [vmem:[%s1 + $0x8] sm:$0xff]
    %v34 = vld [vmem:[%s2] sm:$0x3]
    %v35 = vld [vmem:[%s3] sm:$0x3]
    %v36 = vld [vmem:[%s4] sm:$0xff]
    %v37 = vld [vmem:[%s4 + $0x8] sm:$0xff]
    %v38 = vld [vmem:[%s4 + $0x10] sm:$0xff]
    %v39 = vld [vmem:[%s4 + $0x18] sm:$0xff]
    %v40 = vld [vmem:[%s5] sm:$0xff]
    %v41 = vld [vmem:[%s5 + $0x8] sm:$0xff]
    %v42 = vld [vmem:[%s5 + $0x10] sm:$0xff]
    %v43 = vld [vmem:[%s5 + $0x18] sm:$0xff]
    %v44 = vld [vmem:[%s5 + $0x20] sm:$0xff]
    %v45 = vld [vmem:[%s5 + $0x28] sm:$0xff]
    %v46 = vld [vmem:[%s5 + $0x30] sm:$0xff]
    %v47 = vld [vmem:[%s5 + $0x38] sm:$0xff]
    %v48 = vld [vmem:[%s5 + $0x40] sm:$0xff]
    %v49 = vld [vmem:[%s5 + $0x48] sm:$0xff]
    %v50 = vld [vmem:[%s5 + $0x50] sm:$0xff]
    %v51 = vld [vmem:[%s5 + $0x58] sm:$0xff]
    %v52 = vld [vmem:[%s6] sm:$0x1]
    %vm53 = vcmask 261120
    %v55 = vsel %vm53, %v34, 0
    %57 = vmatprep.subr.mxu0 0.0
    %58 = vmatpush1.msra.mxu0 %v36
    %59 = vmatprep.subr.mxu0 0.0
    %60 = vmatpush1.msra.mxu0 %v37
    %61 = vmatprep.subr.mxu0 0.0
    %62 = vmatpush1.msra.mxu0 %v38
    %63 = vmatprep.subr.mxu0 0.0
    %64 = vmatpush1.msra.mxu0 %v39
    %65 = vmatprep.subr.mxu0 0.0
    %66 = vmatpush1.msra.mxu0 0.0
    %67 = vmatprep.subr.mxu0 0.0
    %68 = vmatpush1.msra.mxu0 0.0
    %69 = vmatprep.subr.mxu0 0.0
    %70 = vmatpush1.msra.mxu0 0.0
    %71 = vmatprep.subr.mxu0 0.0
    %72 = vmatpush1.msra.mxu0 0.0
    %73 = vmatprep.subr.mxu0 0.0
    %74 = vmatpush1.msra.mxu0 0.0
    %75 = vmatprep.subr.mxu0 0.0
    %76 = vmatpush1.msra.mxu0 0.0
    %77 = vmatprep.subr.mxu0 0.0
    %78 = vmatpush1.msra.mxu0 0.0
    %79 = vmatprep.subr.mxu0 0.0
    %80 = vmatpush1.msra.mxu0 0.0
    %81 = vmatprep.subr.mxu0 0.0
    %82 = vmatpush1.msra.mxu0 0.0
    %83 = vmatprep.subr.mxu0 0.0
    %84 = vmatpush1.msra.mxu0 0.0
    %85 = vmatprep.subr.mxu0 0.0
    %86 = vmatpush1.msra.mxu0 0.0
    %87 = vmatprep.subr.mxu0 0.0
    %88 = vmatpush1.msra.mxu0 0.0
    %89 = vmatprep.subr.mxu0 0.0
    %90 = vmatpush1.msra.mxu0 0.0
    %91 = vmatprep.subr.mxu0 0.0
    %92 = vmatpush1.msra.mxu0 0.0
    %93 = vmatprep.subr.mxu0 0.0
    %94 = vmatpush1.msra.mxu0 0.0
    %95 = vmatprep.subr.mxu0 0.0
    %96 = vmatpush1.msra.mxu0 0.0
    %97 = vmatprep.subr.mxu0 0.0
    %98 = vmatpush1.msra.mxu0 0.0
    %99 = vmatprep.subr.mxu0 0.0
    %100 = vmatpush1.msra.mxu0 0.0
    %101 = vmatprep.subr.mxu0 0.0
    %102 = vmatpush1.msra.mxu0 0.0
    %103 = vmatprep.subr.mxu0 0.0
    %104 = vmatpush1.msra.mxu0 0.0
    %105 = vmatprep.subr.mxu0 0.0
    %106 = vmatpush1.msra.mxu0 0.0
    %107 = vmatprep.subr.mxu0 0.0
    %108 = vmatpush1.msra.mxu0 0.0
    %109 = vmatprep.subr.mxu0 0.0
    %110 = vmatpush1.msra.mxu0 0.0
    %111 = vmatprep.subr.mxu0 0.0
    %112 = vmatpush1.msra.mxu0 0.0
    %113 = vmatprep.subr.mxu0 0.0
    %114 = vmatpush1.msra.mxu0 0.0
    %115 = vmatprep.subr.mxu0 0.0
    %116 = vmatpush1.msra.mxu0 0.0
    %117 = vmatprep.subr.mxu0 0.0
    %118 = vmatpush1.msra.mxu0 0.0
    %119 = vmatprep.subr.mxu0 0.0
    %120 = vmatpush1.msra.mxu0 0.0
    %121 = vmatprep.mubr.f32.mxu0 0.0
    %122 = vmatmul.mubr.f32.gmra.mrb[0].mxu0 %v55
    %v123 = vpop.f32.mrb[0].mxu0
    %v124 = vadd.f32 0.0, %v123
    %v125 = vpop.f32.mrb[0].mxu0
    %126 = vdwg.mxu0
    %v129 = vunpack.c.l.s4 1966171168
    %v130 = vunpack.c.0.s8 %v129
    %v131 = vlaneseq
    %v132 = vshrl.u32 %v131, 7
    %v133 = vsub.s32 %v130, %v132
    %v134 = vrot.slane %v124, %v133
    %v135 = vcombine.high %v134, %v134
    %v137 = vunpack.c.l.s4 1966171168
    %v138 = vunpack.c.0.s8 %v137
    %v139 = vlaneseq
    %v140 = vshrl.u32 %v139, 7
    %v141 = vsub.s32 %v138, %v140
    %v142 = vrot.slane %v134, %v141
    %v144 = vunpack.c.l.s4 1966171168
    %v145 = vunpack.c.0.s8 %v144
    %v146 = vlaneseq
    %v147 = vshrl.u32 %v146, 7
    %v148 = vsub.s32 %v145, %v147
    %v149 = vrot.slane %v135, %v148
    %v150 = vsel %vm53, %v142, 0
    %v153 = vsel %vm53, %v32, 0
    %155 = vmatprep.subr.mxu0 0.0
    %156 = vmatpush1.xpose.msra.mxu0 %v153
    %157 = vmatprep.subr.mxu0 0.0
    %158 = vmatpush1.xpose.msra.mxu0 0.0
    %159 = vmatprep.subr.mxu0 0.0
    %160 = vmatpush1.xpose.msra.mxu0 0.0
    %161 = vmatprep.subr.mxu0 0.0
    %162 = vmatpush1.xpose.msra.mxu0 0.0
    %163 = vmatprep.subr.mxu0 0.0
    %164 = vmatpush1.xpose.msra.mxu0 0.0
    %165 = vmatprep.subr.mxu0 0.0
    %166 = vmatpush1.xpose.msra.mxu0 0.0
    %167 = vmatprep.subr.mxu0 0.0
    %168 = vmatpush1.xpose.msra.mxu0 0.0
    %169 = vmatprep.subr.mxu0 0.0
    %170 = vmatpush1.xpose.msra.mxu0 0.0
    %171 = vmatprep.subr.mxu0 0.0
    %172 = vmatpush1.xpose.msra.mxu0 0.0
    %173 = vmatprep.subr.mxu0 0.0
    %174 = vmatpush1.xpose.msra.mxu0 0.0
    %175 = vmatprep.subr.mxu0 0.0
    %176 = vmatpush1.xpose.msra.mxu0 0.0
    %177 = vmatprep.subr.mxu0 0.0
    %178 = vmatpush1.xpose.msra.mxu0 0.0
    %179 = vmatprep.subr.mxu0 0.0
    %180 = vmatpush1.xpose.msra.mxu0 0.0
    %181 = vmatprep.subr.mxu0 0.0
    %182 = vmatpush1.xpose.msra.mxu0 0.0
    %183 = vmatprep.subr.mxu0 0.0
    %184 = vmatpush1.xpose.msra.mxu0 0.0
    %185 = vmatprep.subr.mxu0 0.0
    %186 = vmatpush1.xpose.msra.mxu0 0.0
    %187 = vmatprep.subr.mxu0 0.0
    %188 = vmatpush1.xpose.msra.mxu0 0.0
    %189 = vmatprep.subr.mxu0 0.0
    %190 = vmatpush1.xpose.msra.mxu0 0.0
    %191 = vmatprep.subr.mxu0 0.0
    %192 = vmatpush1.xpose.msra.mxu0 0.0
    %193 = vmatprep.subr.mxu0 0.0
    %194 = vmatpush1.xpose.msra.mxu0 0.0
    %195 = vmatprep.subr.mxu0 0.0
    %196 = vmatpush1.xpose.msra.mxu0 0.0
    %197 = vmatprep.subr.mxu0 0.0
    %198 = vmatpush1.xpose.msra.mxu0 0.0
    %199 = vmatprep.subr.mxu0 0.0
    %200 = vmatpush1.xpose.msra.mxu0 0.0
    %201 = vmatprep.subr.mxu0 0.0
    %202 = vmatpush1.xpose.msra.mxu0 0.0
    %203 = vmatprep.subr.mxu0 0.0
    %204 = vmatpush1.xpose.msra.mxu0 0.0
    %205 = vmatprep.subr.mxu0 0.0
    %206 = vmatpush1.xpose.msra.mxu0 0.0
    %207 = vmatprep.subr.mxu0 0.0
    %208 = vmatpush1.xpose.msra.mxu0 0.0
    %209 = vmatprep.subr.mxu0 0.0
    %210 = vmatpush1.xpose.msra.mxu0 0.0
    %211 = vmatprep.subr.mxu0 0.0
    %212 = vmatpush1.xpose.msra.mxu0 0.0
    %213 = vmatprep.subr.mxu0 0.0
    %214 = vmatpush1.xpose.msra.mxu0 0.0
    %215 = vmatprep.subr.mxu0 0.0
    %216 = vmatpush1.xpose.msra.mxu0 0.0
    %217 = vmatprep.subr.mxu0 0.0
    %218 = vmatpush1.xpose.msra.mxu0 0.0
    %219 = vmatprep.mubr.f32.mxu0 0.0
    %220 = vmatmul.mubr.f32.gmra.mrb[0].mxu0 %v150
    %v221 = vpop.f32.mrb[0].mxu0
    %v222 = vadd.f32 0.0, %v221
    %v223 = vpop.f32.mrb[0].mxu0
    %224 = vdwg.mxu0
    %v225 = vsel %vm53, %v149, 0
    %v228 = vsel %vm53, %v33, 0
    %230 = vmatprep.subr.mxu0 0.0
    %231 = vmatpush1.xpose.msra.mxu0 %v228
    %232 = vmatprep.subr.mxu0 0.0
    %233 = vmatpush1.xpose.msra.mxu0 0.0
    %234 = vmatprep.subr.mxu0 0.0
    %235 = vmatpush1.xpose.msra.mxu0 0.0
    %236 = vmatprep.subr.mxu0 0.0
    %237 = vmatpush1.xpose.msra.mxu0 0.0
    %238 = vmatprep.subr.mxu0 0.0
    %239 = vmatpush1.xpose.msra.mxu0 0.0
    %240 = vmatprep.subr.mxu0 0.0
    %241 = vmatpush1.xpose.msra.mxu0 0.0
    %242 = vmatprep.subr.mxu0 0.0
    %243 = vmatpush1.xpose.msra.mxu0 0.0
    %244 = vmatprep.subr.mxu0 0.0
    %245 = vmatpush1.xpose.msra.mxu0 0.0
    %246 = vmatprep.subr.mxu0 0.0
    %247 = vmatpush1.xpose.msra.mxu0 0.0
    %248 = vmatprep.subr.mxu0 0.0
    %249 = vmatpush1.xpose.msra.mxu0 0.0
    %250 = vmatprep.subr.mxu0 0.0
    %251 = vmatpush1.xpose.msra.mxu0 0.0
    %252 = vmatprep.subr.mxu0 0.0
    %253 = vmatpush1.xpose.msra.mxu0 0.0
    %254 = vmatprep.subr.mxu0 0.0
    %255 = vmatpush1.xpose.msra.mxu0 0.0
    %256 = vmatprep.subr.mxu0 0.0
    %257 = vmatpush1.xpose.msra.mxu0 0.0
    %258 = vmatprep.subr.mxu0 0.0
    %259 = vmatpush1.xpose.msra.mxu0 0.0
    %260 = vmatprep.subr.mxu0 0.0
    %261 = vmatpush1.xpose.msra.mxu0 0.0
    %262 = vmatprep.subr.mxu0 0.0
    %263 = vmatpush1.xpose.msra.mxu0 0.0
    %264 = vmatprep.subr.mxu0 0.0
    %265 = vmatpush1.xpose.msra.mxu0 0.0
    %266 = vmatprep.subr.mxu0 0.0
    %267 = vmatpush1.xpose.msra.mxu0 0.0
    %268 = vmatprep.subr.mxu0 0.0
    %269 = vmatpush1.xpose.msra.mxu0 0.0
    %270 = vmatprep.subr.mxu0 0.0
    %271 = vmatpush1.xpose.msra.mxu0 0.0
    %272 = vmatprep.subr.mxu0 0.0
    %273 = vmatpush1.xpose.msra.mxu0 0.0
    %274 = vmatprep.subr.mxu0 0.0
    %275 = vmatpush1.xpose.msra.mxu0 0.0
    %276 = vmatprep.subr.mxu0 0.0
    %277 = vmatpush1.xpose.msra.mxu0 0.0
    %278 = vmatprep.subr.mxu0 0.0
    %279 = vmatpush1.xpose.msra.mxu0 0.0
    %280 = vmatprep.subr.mxu0 0.0
    %281 = vmatpush1.xpose.msra.mxu0 0.0
    %282 = vmatprep.subr.mxu0 0.0
    %283 = vmatpush1.xpose.msra.mxu0 0.0
    %284 = vmatprep.subr.mxu0 0.0
    %285 = vmatpush1.xpose.msra.mxu0 0.0
    %286 = vmatprep.subr.mxu0 0.0
    %287 = vmatpush1.xpose.msra.mxu0 0.0
    %288 = vmatprep.subr.mxu0 0.0
    %289 = vmatpush1.xpose.msra.mxu0 0.0
    %290 = vmatprep.subr.mxu0 0.0
    %291 = vmatpush1.xpose.msra.mxu0 0.0
    %292 = vmatprep.subr.mxu0 0.0
    %293 = vmatpush1.xpose.msra.mxu0 0.0
    %294 = vmatprep.mubr.f32.mxu0 0.0
    %295 = vmatmul.mubr.f32.gmra.mrb[0].mxu0 %v225
    %v296 = vpop.f32.mrb[0].mxu0
    %v297 = vadd.f32 0.0, %v296
    %v298 = vpop.f32.mrb[0].mxu0
    %299 = vdwg.mxu0
    %vm300 = vcmask 57344
    %v301 = vsel %vm300, %v222, -inf
    %302 = vmax.xlane.f32.xlu0 %v301
    %v303 = vpop.xlane.xlu0 %302
    %v304 = vsel %vm300, %v297, -inf
    %305 = vmax.xlane.f32.xlu0 %v304
    %v306 = vpop.xlane.xlu0 %305
    %v307 = vsub.f32 %v222, %v303
    %v308 = vsub.f32 %v297, %v306
    %v309 = vmul.f32 %v307, 1.442695
    %v310 = vpow.pop %v309
    %v311 = vmul.f32 %v308, 1.442695
    %v312 = vpow.pop %v311
    %v313 = vsel %vm300, %v310, 0.0
    %314 = vadd.xlane.f32.xlu0 %v313
    %v315 = vpop.xlane.xlu0 %314
    %v316 = vsel %vm300, %v312, 0.0
    %317 = vadd.xlane.f32.xlu0 %v316
    %v318 = vpop.xlane.xlu0 %317
    %v319 = vrcp.pop %v315
    %v320 = vrcp.pop %v318
    %v321 = vmul.f32 %v310, %v319
    %v322 = vmul.f32 %v312, %v320
    %vm323 = vcmask 64512
    %v325 = vsel %vm323, %v321, 0
    %327 = vmatprep.subr.mxu0 0.0
    %328 = vmatpush1.msra.mxu0 %v32
    %329 = vmatprep.subr.mxu0 0.0
    %330 = vmatpush1.msra.mxu0 0.0
    %331 = vmatprep.subr.mxu0 0.0
    %332 = vmatpush1.msra.mxu0 0.0
    %333 = vmatprep.subr.mxu0 0.0
    %334 = vmatpush1.msra.mxu0 0.0
    %335 = vmatprep.subr.mxu0 0.0
    %336 = vmatpush1.msra.mxu0 0.0
    %337 = vmatprep.subr.mxu0 0.0
    %338 = vmatpush1.msra.mxu0 0.0
    %339 = vmatprep.subr.mxu0 0.0
    %340 = vmatpush1.msra.mxu0 0.0
    %341 = vmatprep.subr.mxu0 0.0
    %342 = vmatpush1.msra.mxu0 0.0
    %343 = vmatprep.subr.mxu0 0.0
    %344 = vmatpush1.msra.mxu0 0.0
    %345 = vmatprep.subr.mxu0 0.0
    %346 = vmatpush1.msra.mxu0 0.0
    %347 = vmatprep.subr.mxu0 0.0
    %348 = vmatpush1.msra.mxu0 0.0
    %349 = vmatprep.subr.mxu0 0.0
    %350 = vmatpush1.msra.mxu0 0.0
    %351 = vmatprep.subr.mxu0 0.0
    %352 = vmatpush1.msra.mxu0 0.0
    %353 = vmatprep.subr.mxu0 0.0
    %354 = vmatpush1.msra.mxu0 0.0
    %355 = vmatprep.subr.mxu0 0.0
    %356 = vmatpush1.msra.mxu0 0.0
    %357 = vmatprep.subr.mxu0 0.0
    %358 = vmatpush1.msra.mxu0 0.0
    %359 = vmatprep.subr.mxu0 0.0
    %360 = vmatpush1.msra.mxu0 0.0
    %361 = vmatprep.subr.mxu0 0.0
    %362 = vmatpush1.msra.mxu0 0.0
    %363 = vmatprep.subr.mxu0 0.0
    %364 = vmatpush1.msra.mxu0 0.0
    %365 = vmatprep.subr.mxu0 0.0
    %366 = vmatpush1.msra.mxu0 0.0
    %367 = vmatprep.subr.mxu0 0.0
    %368 = vmatpush1.msra.mxu0 0.0
    %369 = vmatprep.subr.mxu0 0.0
    %370 = vmatpush1.msra.mxu0 0.0
    %371 = vmatprep.subr.mxu0 0.0
    %372 = vmatpush1.msra.mxu0 0.0
    %373 = vmatprep.subr.mxu0 0.0
    %374 = vmatpush1.msra.mxu0 0.0
    %375 = vmatprep.subr.mxu0 0.0
    %376 = vmatpush1.msra.mxu0 0.0
    %377 = vmatprep.subr.mxu0 0.0
    %378 = vmatpush1.msra.mxu0 0.0
    %379 = vmatprep.subr.mxu0 0.0
    %380 = vmatpush1.msra.mxu0 0.0
    %381 = vmatprep.subr.mxu0 0.0
    %382 = vmatpush1.msra.mxu0 0.0
    %383 = vmatprep.subr.mxu0 0.0
    %384 = vmatpush1.msra.mxu0 0.0
    %385 = vmatprep.subr.mxu0 0.0
    %386 = vmatpush1.msra.mxu0 0.0
    %387 = vmatprep.subr.mxu0 0.0
    %388 = vmatpush1.msra.mxu0 0.0
    %389 = vmatprep.subr.mxu0 0.0
    %390 = vmatpush1.msra.mxu0 0.0
    %391 = vmatprep.mubr.f32.mxu0 0.0
    %392 = vmatmul.mubr.f32.gmra.mrb[0].mxu0 %v325
    %v393 = vpop.f32.mrb[0].mxu0
    %v394 = vadd.f32 0.0, %v393
    %v395 = vpop.f32.mrb[0].mxu0
    %396 = vdwg.mxu0
    %v398 = vsel %vm323, %v322, 0
    %400 = vmatprep.subr.mxu0 0.0
    %401 = vmatpush1.msra.mxu0 %v33
    %402 = vmatprep.subr.mxu0 0.0
    %403 = vmatpush1.msra.mxu0 0.0
    %404 = vmatprep.subr.mxu0 0.0
    %405 = vmatpush1.msra.mxu0 0.0
    %406 = vmatprep.subr.mxu0 0.0
    %407 = vmatpush1.msra.mxu0 0.0
    %408 = vmatprep.subr.mxu0 0.0
    %409 = vmatpush1.msra.mxu0 0.0
    %410 = vmatprep.subr.mxu0 0.0
    %411 = vmatpush1.msra.mxu0 0.0
    %412 = vmatprep.subr.mxu0 0.0
    %413 = vmatpush1.msra.mxu0 0.0
    %414 = vmatprep.subr.mxu0 0.0
    %415 = vmatpush1.msra.mxu0 0.0
    %416 = vmatprep.subr.mxu0 0.0
    %417 = vmatpush1.msra.mxu0 0.0
    %418 = vmatprep.subr.mxu0 0.0
    %419 = vmatpush1.msra.mxu0 0.0
    %420 = vmatprep.subr.mxu0 0.0
    %421 = vmatpush1.msra.mxu0 0.0
    %422 = vmatprep.subr.mxu0 0.0
    %423 = vmatpush1.msra.mxu0 0.0
    %424 = vmatprep.subr.mxu0 0.0
    %425 = vmatpush1.msra.mxu0 0.0
    %426 = vmatprep.subr.mxu0 0.0
    %427 = vmatpush1.msra.mxu0 0.0
    %428 = vmatprep.subr.mxu0 0.0
    %429 = vmatpush1.msra.mxu0 0.0
    %430 = vmatprep.subr.mxu0 0.0
    %431 = vmatpush1.msra.mxu0 0.0
    %432 = vmatprep.subr.mxu0 0.0
    %433 = vmatpush1.msra.mxu0 0.0
    %434 = vmatprep.subr.mxu0 0.0
    %435 = vmatpush1.msra.mxu0 0.0
    %436 = vmatprep.subr.mxu0 0.0
    %437 = vmatpush1.msra.mxu0 0.0
    %438 = vmatprep.subr.mxu0 0.0
    %439 = vmatpush1.msra.mxu0 0.0
    %440 = vmatprep.subr.mxu0 0.0
    %441 = vmatpush1.msra.mxu0 0.0
    %442 = vmatprep.subr.mxu0 0.0
    %443 = vmatpush1.msra.mxu0 0.0
    %444 = vmatprep.subr.mxu0 0.0
    %445 = vmatpush1.msra.mxu0 0.0
    %446 = vmatprep.subr.mxu0 0.0
    %447 = vmatpush1.msra.mxu0 0.0
    %448 = vmatprep.subr.mxu0 0.0
    %449 = vmatpush1.msra.mxu0 0.0
    %450 = vmatprep.subr.mxu0 0.0
    %451 = vmatpush1.msra.mxu0 0.0
    %452 = vmatprep.subr.mxu0 0.0
    %453 = vmatpush1.msra.mxu0 0.0
    %454 = vmatprep.subr.mxu0 0.0
    %455 = vmatpush1.msra.mxu0 0.0
    %456 = vmatprep.subr.mxu0 0.0
    %457 = vmatpush1.msra.mxu0 0.0
    %458 = vmatprep.subr.mxu0 0.0
    %459 = vmatpush1.msra.mxu0 0.0
    %460 = vmatprep.subr.mxu0 0.0
    %461 = vmatpush1.msra.mxu0 0.0
    %462 = vmatprep.subr.mxu0 0.0
    %463 = vmatpush1.msra.mxu0 0.0
    %464 = vmatprep.mubr.f32.mxu0 0.0
    %465 = vmatmul.mubr.f32.gmra.mrb[0].mxu0 %v398
    %v466 = vpop.f32.mrb[0].mxu0
    %v467 = vadd.f32 0.0, %v466
    %v468 = vpop.f32.mrb[0].mxu0
    %469 = vdwg.mxu0
    %v472 = vrot.slane %v467, 7
    %vm473 = vcmask 1041409
    %v474 = vsel %vm473, %v472, %v394
    %475 = vrot.lane.b32.xlu0 %v474, 32
    %v476 = vpop.permute.xlu0 %475
    %478 = vrot.lane.b32.xlu0 %v34, 64
    %v479 = vpop.permute.xlu0 %478
    %v481 = vsel %vm53, %v31, %v476
    %vm482 = vcmask 523264
    %v483 = vsel %vm482, %v481, %v479
    %v485 = vlaneseq
    %v486 = vshrl.u32 %v485, 7
    %v487 = vsub.s32 0, %v486
    %v488 = vrot.slane %v52, %v487
    %vm490 = vcmask 785408
    %v492 = vsel %vm490, %v483, 0
    %494 = vmatprep.subr.mxu0 0.0
    %495 = vmatpush1.msra.mxu0 %v40
    %496 = vmatprep.subr.mxu0 0.0
    %497 = vmatpush1.msra.mxu0 %v41
    %498 = vmatprep.subr.mxu0 0.0
    %499 = vmatpush1.msra.mxu0 %v42
    %500 = vmatprep.subr.mxu0 0.0
    %501 = vmatpush1.msra.mxu0 %v43
    %502 = vmatprep.subr.mxu0 0.0
    %503 = vmatpush1.msra.mxu0 %v44
    %504 = vmatprep.subr.mxu0 0.0
    %505 = vmatpush1.msra.mxu0 %v45
    %506 = vmatprep.subr.mxu0 0.0
    %507 = vmatpush1.msra.mxu0 %v46
    %508 = vmatprep.subr.mxu0 0.0
    %509 = vmatpush1.msra.mxu0 %v47
    %510 = vmatprep.subr.mxu0 0.0
    %511 = vmatpush1.msra.mxu0 %v48
    %512 = vmatprep.subr.mxu0 0.0
    %513 = vmatpush1.msra.mxu0 %v49
    %514 = vmatprep.subr.mxu0 0.0
    %515 = vmatpush1.msra.mxu0 %v50
    %516 = vmatprep.subr.mxu0 0.0
    %517 = vmatpush1.msra.mxu0 %v51
    %518 = vmatprep.subr.mxu0 0.0
    %519 = vmatpush1.msra.mxu0 0.0
    %520 = vmatprep.subr.mxu0 0.0
    %521 = vmatpush1.msra.mxu0 0.0
    %522 = vmatprep.subr.mxu0 0.0
    %523 = vmatpush1.msra.mxu0 0.0
    %524 = vmatprep.subr.mxu0 0.0
    %525 = vmatpush1.msra.mxu0 0.0
    %526 = vmatprep.subr.mxu0 0.0
    %527 = vmatpush1.msra.mxu0 0.0
    %528 = vmatprep.subr.mxu0 0.0
    %529 = vmatpush1.msra.mxu0 0.0
    %530 = vmatprep.subr.mxu0 0.0
    %531 = vmatpush1.msra.mxu0 0.0
    %532 = vmatprep.subr.mxu0 0.0
    %533 = vmatpush1.msra.mxu0 0.0
    %534 = vmatprep.subr.mxu0 0.0
    %535 = vmatpush1.msra.mxu0 0.0
    %536 = vmatprep.subr.mxu0 0.0
    %537 = vmatpush1.msra.mxu0 0.0
    %538 = vmatprep.subr.mxu0 0.0
    %539 = vmatpush1.msra.mxu0 0.0
    %540 = vmatprep.subr.mxu0 0.0
    %541 = vmatpush1.msra.mxu0 0.0
    %542 = vmatprep.subr.mxu0 0.0
    %543 = vmatpush1.msra.mxu0 0.0
    %544 = vmatprep.subr.mxu0 0.0
    %545 = vmatpush1.msra.mxu0 0.0
    %546 = vmatprep.subr.mxu0 0.0
    %547 = vmatpush1.msra.mxu0 0.0
    %548 = vmatprep.subr.mxu0 0.0
    %549 = vmatpush1.msra.mxu0 0.0
    %550 = vmatprep.subr.mxu0 0.0
    %551 = vmatpush1.msra.mxu0 0.0
    %552 = vmatprep.subr.mxu0 0.0
    %553 = vmatpush1.msra.mxu0 0.0
    %554 = vmatprep.subr.mxu0 0.0
    %555 = vmatpush1.msra.mxu0 0.0
    %556 = vmatprep.subr.mxu0 0.0
    %557 = vmatpush1.msra.mxu0 0.0
    %558 = vmatprep.mubr.f32.mxu0 0.0
    %559 = vmatmul.mubr.f32.gmra.mrb[0].mxu0 %v492
    %v560 = vpop.f32.mrb[0].mxu0
    %v561 = vadd.f32 %v488, %v560
    %v562 = vpop.f32.mrb[0].mxu0
    %563 = vdwg.mxu0
    %v564 = vxor.u32 %v561, 2147483648
    %v565 = vmul.f32 %v564, 1.442695
    %v566 = vpow.pop %v565
    %v567 = vadd.f32 %v566, 1.0
    %v568 = vrcp.pop %v567
    %v569 = vmul.f32 1.0, %v568
    %v570 = vtanh.pop %v561
    %572 = vrot.lane.b32.xlu0 %v35, 32
    %v573 = vpop.permute.xlu0 %572
    %v575 = vmul.f32 %v569, %v573
    %577 = vrot.lane.b32.xlu0 %v570, 64
    %v578 = vpop.permute.xlu0 %577
    %v580 = vmul.f32 %v569, %v578
    %582 = vrot.lane.b32.xlu0 %v580, 32
    %v583 = vpop.permute.xlu0 %582
    %v585 = vadd.f32 %v575, %v583
    %v586 = vtanh.pop %v585
    %588 = vrot.lane.b32.xlu0 %v586, 64
    %v589 = vpop.permute.xlu0 %588
    %v591 = vmul.f32 %v569, %v589
    %v592 = vrot.slane %v322, 7
    %v593 = vsel %vm473, %v592, %v321
    %vm595 = vcmask 58368
    %596 = vst.msk [vmem:[#allocation6] sm:$0x3] %vm595, %v593
    %s597 = scalar_lea.vmem %s4, 32
    %v598 = vld [vmem:[%s597] sm:$0xff]
    %v599 = vld [vmem:[%s597 + $0x8] sm:$0xff]
    %v600 = vld [vmem:[%s597 + $0x10] sm:$0xff]
    %v601 = vld [vmem:[%s597 + $0x18] sm:$0xff]
    %s602 = scalar_lea.vmem %s5, 96
    %v603 = vld [vmem:[%s602] sm:$0xff]
    %v604 = vld [vmem:[%s602 + $0x8] sm:$0xff]
    %v605 = vld [vmem:[%s602 + $0x10] sm:$0xff]
    %v606 = vld [vmem:[%s602 + $0x18] sm:$0xff]
    %v607 = vld [vmem:[%s602 + $0x20] sm:$0xff]
    %v608 = vld [vmem:[%s602 + $0x28] sm:$0xff]
    %v609 = vld [vmem:[%s602 + $0x30] sm:$0xff]
    %v610 = vld [vmem:[%s602 + $0x38] sm:$0xff]
    %v611 = vld [vmem:[%s602 + $0x40] sm:$0xff]
    %v612 = vld [vmem:[%s602 + $0x48] sm:$0xff]
    %v613 = vld [vmem:[%s602 + $0x50] sm:$0xff]
    %v614 = vld [vmem:[%s602 + $0x58] sm:$0xff]
    %s615 = scalar_lea.vmem %s6, 1
    %v616 = vld [vmem:[%s615] sm:$0x1]
    %618 = vrot.lane.b32.xlu0 %v591, 32
    %v619 = vpop.permute.xlu0 %618
    %v620 = vsel %vm53, %v619, 0
    %622 = vmatprep.subr.mxu0 0.0
    %623 = vmatpush1.msra.mxu0 %v598
    %624 = vmatprep.subr.mxu0 0.0
    %625 = vmatpush1.msra.mxu0 %v599
    %626 = vmatprep.subr.mxu0 0.0
    %627 = vmatpush1.msra.mxu0 %v600
    %628 = vmatprep.subr.mxu0 0.0
    %629 = vmatpush1.msra.mxu0 %v601
    %630 = vmatprep.subr.mxu0 0.0
    %631 = vmatpush1.msra.mxu0 0.0
    %632 = vmatprep.subr.mxu0 0.0
    %633 = vmatpush1.msra.mxu0 0.0
    %634 = vmatprep.subr.mxu0 0.0
    %635 = vmatpush1.msra.mxu0 0.0
    %636 = vmatprep.subr.mxu0 0.0
    %637 = vmatpush1.msra.mxu0 0.0
    %638 = vmatprep.subr.mxu0 0.0
    %639 = vmatpush1.msra.mxu0 0.0
    %640 = vmatprep.subr.mxu0 0.0
    %641 = vmatpush1.msra.mxu0 0.0
    %642 = vmatprep.subr.mxu0 0.0
    %643 = vmatpush1.msra.mxu0 0.0
    %644 = vmatprep.subr.mxu0 0.0
    %645 = vmatpush1.msra.mxu0 0.0
    %646 = vmatprep.subr.mxu0 0.0
    %647 = vmatpush1.msra.mxu0 0.0
    %648 = vmatprep.subr.mxu0 0.0
    %649 = vmatpush1.msra.mxu0 0.0
    %650 = vmatprep.subr.mxu0 0.0
    %651 = vmatpush1.msra.mxu0 0.0
    %652 = vmatprep.subr.mxu0 0.0
    %653 = vmatpush1.msra.mxu0 0.0
    %654 = vmatprep.subr.mxu0 0.0
    %655 = vmatpush1.msra.mxu0 0.0
    %656 = vmatprep.subr.mxu0 0.0
    %657 = vmatpush1.msra.mxu0 0.0
    %658 = vmatprep.subr.mxu0 0.0
    %659 = vmatpush1.msra.mxu0 0.0
    %660 = vmatprep.subr.mxu0 0.0
    %661 = vmatpush1.msra.mxu0 0.0
    %662 = vmatprep.subr.mxu0 0.0
    %663 = vmatpush1.msra.mxu0 0.0
    %664 = vmatprep.subr.mxu0 0.0
    %665 = vmatpush1.msra.mxu0 0.0
    %666 = vmatprep.subr.mxu0 0.0
    %667 = vmatpush1.msra.mxu0 0.0
    %668 = vmatprep.subr.mxu0 0.0
    %669 = vmatpush1.msra.mxu0 0.0
    %670 = vmatprep.subr.mxu0 0.0
    %671 = vmatpush1.msra.mxu0 0.0
    %672 = vmatprep.subr.mxu0 0.0
    %673 = vmatpush1.msra.mxu0 0.0
    %674 = vmatprep.subr.mxu0 0.0
    %675 = vmatpush1.msra.mxu0 0.0
    %676 = vmatprep.subr.mxu0 0.0
    %677 = vmatpush1.msra.mxu0 0.0
    %678 = vmatprep.subr.mxu0 0.0
    %679 = vmatpush1.msra.mxu0 0.0
    %680 = vmatprep.subr.mxu0 0.0
    %681 = vmatpush1.msra.mxu0 0.0
    %682 = vmatprep.subr.mxu0 0.0
    %683 = vmatpush1.msra.mxu0 0.0
    %684 = vmatprep.subr.mxu0 0.0
    %685 = vmatpush1.msra.mxu0 0.0
    %686 = vmatprep.mubr.f32.mxu0 0.0
    %687 = vmatmul.mubr.f32.gmra.mrb[0].mxu0 %v620
    %v688 = vpop.f32.mrb[0].mxu0
    %v689 = vadd.f32 0.0, %v688
    %v690 = vpop.f32.mrb[0].mxu0
    %691 = vdwg.mxu0
    %v694 = vunpack.c.l.s4 1966171168
    %v695 = vunpack.c.0.s8 %v694
    %v696 = vlaneseq
    %v697 = vshrl.u32 %v696, 7
    %v698 = vsub.s32 %v695, %v697
    %v699 = vrot.slane %v689, %v698
    %v700 = vcombine.high %v699, %v699
    %v702 = vunpack.c.l.s4 1966171168
    %v703 = vunpack.c.0.s8 %v702
    %v704 = vlaneseq
    %v705 = vshrl.u32 %v704, 7
    %v706 = vsub.s32 %v703, %v705
    %v707 = vrot.slane %v699, %v706
    %v709 = vunpack.c.l.s4 1966171168
    %v710 = vunpack.c.0.s8 %v709
    %v711 = vlaneseq
    %v712 = vshrl.u32 %v711, 7
    %v713 = vsub.s32 %v710, %v712
    %v714 = vrot.slane %v700, %v713
    %v715 = vsel %vm53, %v707, 0
    %717 = vmatprep.subr.mxu0 0.0
    %718 = vmatpush1.xpose.msra.mxu0 %v153
    %719 = vmatprep.subr.mxu0 0.0
    %720 = vmatpush1.xpose.msra.mxu0 0.0
    %721 = vmatprep.subr.mxu0 0.0
    %722 = vmatpush1.xpose.msra.mxu0 0.0
    %723 = vmatprep.subr.mxu0 0.0
    %724 = vmatpush1.xpose.msra.mxu0 0.0
    %725 = vmatprep.subr.mxu0 0.0
    %726 = vmatpush1.xpose.msra.mxu0 0.0
    %727 = vmatprep.subr.mxu0 0.0
    %728 = vmatpush1.xpose.msra.mxu0 0.0
    %729 = vmatprep.subr.mxu0 0.0
    %730 = vmatpush1.xpose.msra.mxu0 0.0
    %731 = vmatprep.subr.mxu0 0.0
    %732 = vmatpush1.xpose.msra.mxu0 0.0
    %733 = vmatprep.subr.mxu0 0.0
    %734 = vmatpush1.xpose.msra.mxu0 0.0
    %735 = vmatprep.subr.mxu0 0.0
    %736 = vmatpush1.xpose.msra.mxu0 0.0
    %737 = vmatprep.subr.mxu0 0.0
    %738 = vmatpush1.xpose.msra.mxu0 0.0
    %739 = vmatprep.subr.mxu0 0.0
    %740 = vmatpush1.xpose.msra.mxu0 0.0
    %741 = vmatprep.subr.mxu0 0.0
    %742 = vmatpush1.xpose.msra.mxu0 0.0
    %743 = vmatprep.subr.mxu0 0.0
    %744 = vmatpush1.xpose.msra.mxu0 0.0
    %745 = vmatprep.subr.mxu0 0.0
    %746 = vmatpush1.xpose.msra.mxu0 0.0
    %747 = vmatprep.subr.mxu0 0.0
    %748 = vmatpush1.xpose.msra.mxu0 0.0
    %749 = vmatprep.subr.mxu0 0.0
    %750 = vmatpush1.xpose.msra.mxu0 0.0
    %751 = vmatprep.subr.mxu0 0.0
    %752 = vmatpush1.xpose.msra.mxu0 0.0
    %753 = vmatprep.subr.mxu0 0.0
    %754 = vmatpush1.xpose.msra.mxu0 0.0
    %755 = vmatprep.subr.mxu0 0.0
    %756 = vmatpush1.xpose.msra.mxu0 0.0
    %757 = vmatprep.subr.mxu0 0.0
    %758 = vmatpush1.xpose.msra.mxu0 0.0
    %759 = vmatprep.subr.mxu0 0.0
    %760 = vmatpush1.xpose.msra.mxu0 0.0
    %761 = vmatprep.subr.mxu0 0.0
    %762 = vmatpush1.xpose.msra.mxu0 0.0
    %763 = vmatprep.subr.mxu0 0.0
    %764 = vmatpush1.xpose.msra.mxu0 0.0
    %765 = vmatprep.subr.mxu0 0.0
    %766 = vmatpush1.xpose.msra.mxu0 0.0
    %767 = vmatprep.subr.mxu0 0.0
    %768 = vmatpush1.xpose.msra.mxu0 0.0
    %769 = vmatprep.subr.mxu0 0.0
    %770 = vmatpush1.xpose.msra.mxu0 0.0
    %771 = vmatprep.subr.mxu0 0.0
    %772 = vmatpush1.xpose.msra.mxu0 0.0
    %773 = vmatprep.subr.mxu0 0.0
    %774 = vmatpush1.xpose.msra.mxu0 0.0
    %775 = vmatprep.subr.mxu0 0.0
    %776 = vmatpush1.xpose.msra.mxu0 0.0
    %777 = vmatprep.subr.mxu0 0.0
    %778 = vmatpush1.xpose.msra.mxu0 0.0
    %779 = vmatprep.subr.mxu0 0.0
    %780 = vmatpush1.xpose.msra.mxu0 0.0
    %781 = vmatprep.mubr.f32.mxu0 0.0
    %782 = vmatmul.mubr.f32.gmra.mrb[0].mxu0 %v715
    %v783 = vpop.f32.mrb[0].mxu0
    %v784 = vadd.f32 0.0, %v783
    %v785 = vpop.f32.mrb[0].mxu0
    %786 = vdwg.mxu0
    %v787 = vsel %vm53, %v714, 0
    %789 = vmatprep.subr.mxu0 0.0
    %790 = vmatpush1.xpose.msra.mxu0 %v228
    %791 = vmatprep.subr.mxu0 0.0
    %792 = vmatpush1.xpose.msra.mxu0 0.0
    %793 = vmatprep.subr.mxu0 0.0
    %794 = vmatpush1.xpose.msra.mxu0 0.0
    %795 = vmatprep.subr.mxu0 0.0
    %796 = vmatpush1.xpose.msra.mxu0 0.0
    %797 = vmatprep.subr.mxu0 0.0
    %798 = vmatpush1.xpose.msra.mxu0 0.0
    %799 = vmatprep.subr.mxu0 0.0
    %800 = vmatpush1.xpose.msra.mxu0 0.0
    %801 = vmatprep.subr.mxu0 0.0
    %802 = vmatpush1.xpose.msra.mxu0 0.0
    %803 = vmatprep.subr.mxu0 0.0
    %804 = vmatpush1.xpose.msra.mxu0 0.0
    %805 = vmatprep.subr.mxu0 0.0
    %806 = vmatpush1.xpose.msra.mxu0 0.0
    %807 = vmatprep.subr.mxu0 0.0
    %808 = vmatpush1.xpose.msra.mxu0 0.0
    %809 = vmatprep.subr.mxu0 0.0
    %810 = vmatpush1.xpose.msra.mxu0 0.0
    %811 = vmatprep.subr.mxu0 0.0
    %812 = vmatpush1.xpose.msra.mxu0 0.0
    %813 = vmatprep.subr.mxu0 0.0
    %814 = vmatpush1.xpose.msra.mxu0 0.0
    %815 = vmatprep.subr.mxu0 0.0
    %816 = vmatpush1.xpose.msra.mxu0 0.0
    %817 = vmatprep.subr.mxu0 0.0
    %818 = vmatpush1.xpose.msra.mxu0 0.0
    %819 = vmatprep.subr.mxu0 0.0
    %820 = vmatpush1.xpose.msra.mxu0 0.0
    %821 = vmatprep.subr.mxu0 0.0
    %822 = vmatpush1.xpose.msra.mxu0 0.0
    %823 = vmatprep.subr.mxu0 0.0
    %824 = vmatpush1.xpose.msra.mxu0 0.0
    %825 = vmatprep.subr.mxu0 0.0
    %826 = vmatpush1.xpose.msra.mxu0 0.0
    %827 = vmatprep.subr.mxu0 0.0
    %828 = vmatpush1.xpose.msra.mxu0 0.0
    %829 = vmatprep.subr.mxu0 0.0
    %830 = vmatpush1.xpose.msra.mxu0 0.0
    %831 = vmatprep.subr.mxu0 0.0
    %832 = vmatpush1.xpose.msra.mxu0 0.0
    %833 = vmatprep.subr.mxu0 0.0
    %834 = vmatpush1.xpose.msra.mxu0 0.0
    %835 = vmatprep.subr.mxu0 0.0
    %836 = vmatpush1.xpose.msra.mxu0 0.0
    %837 = vmatprep.subr.mxu0 0.0
    %838 = vmatpush1.xpose.msra.mxu0 0.0
    %839 = vmatprep.subr.mxu0 0.0
    %840 = vmatpush1.xpose.msra.mxu0 0.0
    %841 = vmatprep.subr.mxu0 0.0
    %842 = vmatpush1.xpose.msra.mxu0 0.0
    %843 = vmatprep.subr.mxu0 0.0
    %844 = vmatpush1.xpose.msra.mxu0 0.0
    %845 = vmatprep.subr.mxu0 0.0
    %846 = vmatpush1.xpose.msra.mxu0 0.0
    %847 = vmatprep.subr.mxu0 0.0
    %848 = vmatpush1.xpose.msra.mxu0 0.0
    %849 = vmatprep.subr.mxu0 0.0
    %850 = vmatpush1.xpose.msra.mxu0 0.0
    %851 = vmatprep.subr.mxu0 0.0
    %852 = vmatpush1.xpose.msra.mxu0 0.0
    %853 = vmatprep.mubr.f32.mxu0 0.0
    %854 = vmatmul.mubr.f32.gmra.mrb[0].mxu0 %v787
    %v855 = vpop.f32.mrb[0].mxu0
    %v856 = vadd.f32 0.0, %v855
    %v857 = vpop.f32.mrb[0].mxu0
    %858 = vdwg.mxu0
    %v859 = vsel %vm300, %v784, -inf
    %860 = vmax.xlane.f32.xlu0 %v859
    %v861 = vpop.xlane.xlu0 %860
    %v862 = vsel %vm300, %v856, -inf
    %863 = vmax.xlane.f32.xlu0 %v862
    %v864 = vpop.xlane.xlu0 %863
    %v865 = vsub.f32 %v784, %v861
    %v866 = vsub.f32 %v856, %v864
    %v867 = vmul.f32 %v865, 1.442695
    %v868 = vpow.pop %v867
    %v869 = vmul.f32 %v866, 1.442695
    %v870 = vpow.pop %v869
    %v871 = vsel %vm300, %v868, 0.0
    %872 = vadd.xlane.f32.xlu0 %v871
    %v873 = vpop.xlane.xlu0 %872
    %v874 = vsel %vm300, %v870, 0.0
    %875 = vadd.xlane.f32.xlu0 %v874
    %v876 = vpop.xlane.xlu0 %875
    %v877 = vrcp.pop %v873
    %v878 = vrcp.pop %v876
    %v879 = vmul.f32 %v868, %v877
    %v880 = vmul.f32 %v870, %v878
    %v882 = vsel %vm323, %v879, 0
    %884 = vmatprep.subr.mxu0 0.0
    %885 = vmatpush1.msra.mxu0 %v32
    %886 = vmatprep.subr.mxu0 0.0
    %887 = vmatpush1.msra.mxu0 0.0
    %888 = vmatprep.subr.mxu0 0.0
    %889 = vmatpush1.msra.mxu0 0.0
    %890 = vmatprep.subr.mxu0 0.0
    %891 = vmatpush1.msra.mxu0 0.0
    %892 = vmatprep.subr.mxu0 0.0
    %893 = vmatpush1.msra.mxu0 0.0
    %894 = vmatprep.subr.mxu0 0.0
    %895 = vmatpush1.msra.mxu0 0.0
    %896 = vmatprep.subr.mxu0 0.0
    %897 = vmatpush1.msra.mxu0 0.0
    %898 = vmatprep.subr.mxu0 0.0
    %899 = vmatpush1.msra.mxu0 0.0
    %900 = vmatprep.subr.mxu0 0.0
    %901 = vmatpush1.msra.mxu0 0.0
    %902 = vmatprep.subr.mxu0 0.0
    %903 = vmatpush1.msra.mxu0 0.0
    %904 = vmatprep.subr.mxu0 0.0
    %905 = vmatpush1.msra.mxu0 0.0
    %906 = vmatprep.subr.mxu0 0.0
    %907 = vmatpush1.msra.mxu0 0.0
    %908 = vmatprep.subr.mxu0 0.0
    %909 = vmatpush1.msra.mxu0 0.0
    %910 = vmatprep.subr.mxu0 0.0
    %911 = vmatpush1.msra.mxu0 0.0
    %912 = vmatprep.subr.mxu0 0.0
    %913 = vmatpush1.msra.mxu0 0.0
    %914 = vmatprep.subr.mxu0 0.0
    %915 = vmatpush1.msra.mxu0 0.0
    %916 = vmatprep.subr.mxu0 0.0
    %917 = vmatpush1.msra.mxu0 0.0
    %918 = vmatprep.subr.mxu0 0.0
    %919 = vmatpush1.msra.mxu0 0.0
    %920 = vmatprep.subr.mxu0 0.0
    %921 = vmatpush1.msra.mxu0 0.0
    %922 = vmatprep.subr.mxu0 0.0
    %923 = vmatpush1.msra.mxu0 0.0
    %924 = vmatprep.subr.mxu0 0.0
    %925 = vmatpush1.msra.mxu0 0.0
    %926 = vmatprep.subr.mxu0 0.0
    %927 = vmatpush1.msra.mxu0 0.0
    %928 = vmatprep.subr.mxu0 0.0
    %929 = vmatpush1.msra.mxu0 0.0
    %930 = vmatprep.subr.mxu0 0.0
    %931 = vmatpush1.msra.mxu0 0.0
    %932 = vmatprep.subr.mxu0 0.0
    %933 = vmatpush1.msra.mxu0 0.0
    %934 = vmatprep.subr.mxu0 0.0
    %935 = vmatpush1.msra.mxu0 0.0
    %936 = vmatprep.subr.mxu0 0.0
    %937 = vmatpush1.msra.mxu0 0.0
    %938 = vmatprep.subr.mxu0 0.0
    %939 = vmatpush1.msra.mxu0 0.0
    %940 = vmatprep.subr.mxu0 0.0
    %941 = vmatpush1.msra.mxu0 0.0
    %942 = vmatprep.subr.mxu0 0.0
    %943 = vmatpush1.msra.mxu0 0.0
    %944 = vmatprep.subr.mxu0 0.0
    %945 = vmatpush1.msra.mxu0 0.0
    %946 = vmatprep.subr.mxu0 0.0
    %947 = vmatpush1.msra.mxu0 0.0
    %948 = vmatprep.mubr.f32.mxu0 0.0
    %949 = vmatmul.mubr.f32.gmra.mrb[0].mxu0 %v882
    %v950 = vpop.f32.mrb[0].mxu0
    %v951 = vadd.f32 0.0, %v950
    %v952 = vpop.f32.mrb[0].mxu0
    %953 = vdwg.mxu0
    %v955 = vsel %vm323, %v880, 0
    %957 = vmatprep.subr.mxu0 0.0
    %958 = vmatpush1.msra.mxu0 %v33
    %959 = vmatprep.subr.mxu0 0.0
    %960 = vmatpush1.msra.mxu0 0.0
    %961 = vmatprep.subr.mxu0 0.0
    %962 = vmatpush1.msra.mxu0 0.0
    %963 = vmatprep.subr.mxu0 0.0
    %964 = vmatpush1.msra.mxu0 0.0
    %965 = vmatprep.subr.mxu0 0.0
    %966 = vmatpush1.msra.mxu0 0.0
    %967 = vmatprep.subr.mxu0 0.0
    %968 = vmatpush1.msra.mxu0 0.0
    %969 = vmatprep.subr.mxu0 0.0
    %970 = vmatpush1.msra.mxu0 0.0
    %971 = vmatprep.subr.mxu0 0.0
    %972 = vmatpush1.msra.mxu0 0.0
    %973 = vmatprep.subr.mxu0 0.0
    %974 = vmatpush1.msra.mxu0 0.0
    %975 = vmatprep.subr.mxu0 0.0
    %976 = vmatpush1.msra.mxu0 0.0
    %977 = vmatprep.subr.mxu0 0.0
    %978 = vmatpush1.msra.mxu0 0.0
    %979 = vmatprep.subr.mxu0 0.0
    %980 = vmatpush1.msra.mxu0 0.0
    %981 = vmatprep.subr.mxu0 0.0
    %982 = vmatpush1.msra.mxu0 0.0
    %983 = vmatprep.subr.mxu0 0.0
    %984 = vmatpush1.msra.mxu0 0.0
    %985 = vmatprep.subr.mxu0 0.0
    %986 = vmatpush1.msra.mxu0 0.0
    %987 = vmatprep.subr.mxu0 0.0
    %988 = vmatpush1.msra.mxu0 0.0
    %989 = vmatprep.subr.mxu0 0.0
    %990 = vmatpush1.msra.mxu0 0.0
    %991 = vmatprep.subr.mxu0 0.0
    %992 = vmatpush1.msra.mxu0 0.0
    %993 = vmatprep.subr.mxu0 0.0
    %994 = vmatpush1.msra.mxu0 0.0
    %995 = vmatprep.subr.mxu0 0.0
    %996 = vmatpush1.msra.mxu0 0.0
    %997 = vmatprep.subr.mxu0 0.0
    %998 = vmatpush1.msra.mxu0 0.0
    %999 = vmatprep.subr.mxu0 0.0
    %1000 = vmatpush1.msra.mxu0 0.0
    %1001 = vmatprep.subr.mxu0 0.0
    %1002 = vmatpush1.msra.mxu0 0.0
    %1003 = vmatprep.subr.mxu0 0.0
    %1004 = vmatpush1.msra.mxu0 0.0
    %1005 = vmatprep.subr.mxu0 0.0
    %1006 = vmatpush1.msra.mxu0 0.0
    %1007 = vmatprep.subr.mxu0 0.0
    %1008 = vmatpush1.msra.mxu0 0.0
    %1009 = vmatprep.subr.mxu0 0.0
    %1010 = vmatpush1.msra.mxu0 0.0
    %1011 = vmatprep.subr.mxu0 0.0
    %1012 = vmatpush1.msra.mxu0 0.0
    %1013 = vmatprep.subr.mxu0 0.0
    %1014 = vmatpush1.msra.mxu0 0.0
    %1015 = vmatprep.subr.mxu0 0.0
    %1016 = vmatpush1.msra.mxu0 0.0
    %1017 = vmatprep.subr.mxu0 0.0
    %1018 = vmatpush1.msra.mxu0 0.0
    %1019 = vmatprep.subr.mxu0 0.0
    %1020 = vmatpush1.msra.mxu0 0.0
    %1021 = vmatprep.mubr.f32.mxu0 0.0
    %1022 = vmatmul.mubr.f32.gmra.mrb[0].mxu0 %v955
    %v1023 = vpop.f32.mrb[0].mxu0
    %v1024 = vadd.f32 0.0, %v1023
    %v1025 = vpop.f32.mrb[0].mxu0
    %1026 = vdwg.mxu0
    %v1029 = vrot.slane %v1024, 7
    %v1030 = vsel %vm473, %v1029, %v951
    %1031 = vrot.lane.b32.xlu0 %v1030, 32
    %v1032 = vpop.permute.xlu0 %1031
    %1034 = vrot.lane.b32.xlu0 %v591, 96
    %v1035 = vpop.permute.xlu0 %1034
    %v1037 = vsel %vm53, %v31, %v1032
    %v1038 = vsel %vm482, %v1037, %v1035
    %v1040 = vlaneseq
    %v1041 = vshrl.u32 %v1040, 7
    %v1042 = vsub.s32 0, %v1041
    %v1043 = vrot.slane %v616, %v1042
    %v1046 = vsel %vm490, %v1038, 0
    %1048 = vmatprep.subr.mxu0 0.0
    %1049 = vmatpush1.msra.mxu0 %v603
    %1050 = vmatprep.subr.mxu0 0.0
    %1051 = vmatpush1.msra.mxu0 %v604
    %1052 = vmatprep.subr.mxu0 0.0
    %1053 = vmatpush1.msra.mxu0 %v605
    %1054 = vmatprep.subr.mxu0 0.0
    %1055 = vmatpush1.msra.mxu0 %v606
    %1056 = vmatprep.subr.mxu0 0.0
    %1057 = vmatpush1.msra.mxu0 %v607
    %1058 = vmatprep.subr.mxu0 0.0
    %1059 = vmatpush1.msra.mxu0 %v608
    %1060 = vmatprep.subr.mxu0 0.0
    %1061 = vmatpush1.msra.mxu0 %v609
    %1062 = vmatprep.subr.mxu0 0.0
    %1063 = vmatpush1.msra.mxu0 %v610
    %1064 = vmatprep.subr.mxu0 0.0
    %1065 = vmatpush1.msra.mxu0 %v611
    %1066 = vmatprep.subr.mxu0 0.0
    %1067 = vmatpush1.msra.mxu0 %v612
    %1068 = vmatprep.subr.mxu0 0.0
    %1069 = vmatpush1.msra.mxu0 %v613
    %1070 = vmatprep.subr.mxu0 0.0
    %1071 = vmatpush1.msra.mxu0 %v614
    %1072 = vmatprep.subr.mxu0 0.0
    %1073 = vmatpush1.msra.mxu0 0.0
    %1074 = vmatprep.subr.mxu0 0.0
    %1075 = vmatpush1.msra.mxu0 0.0
    %1076 = vmatprep.subr.mxu0 0.0
    %1077 = vmatpush1.msra.mxu0 0.0
    %1078 = vmatprep.subr.mxu0 0.0
    %1079 = vmatpush1.msra.mxu0 0.0
    %1080 = vmatprep.subr.mxu0 0.0
    %1081 = vmatpush1.msra.mxu0 0.0
    %1082 = vmatprep.subr.mxu0 0.0
    %1083 = vmatpush1.msra.mxu0 0.0
    %1084 = vmatprep.subr.mxu0 0.0
    %1085 = vmatpush1.msra.mxu0 0.0
    %1086 = vmatprep.subr.mxu0 0.0
    %1087 = vmatpush1.msra.mxu0 0.0
    %1088 = vmatprep.subr.mxu0 0.0
    %1089 = vmatpush1.msra.mxu0 0.0
    %1090 = vmatprep.subr.mxu0 0.0
    %1091 = vmatpush1.msra.mxu0 0.0
    %1092 = vmatprep.subr.mxu0 0.0
    %1093 = vmatpush1.msra.mxu0 0.0
    %1094 = vmatprep.subr.mxu0 0.0
    %1095 = vmatpush1.msra.mxu0 0.0
    %1096 = vmatprep.subr.mxu0 0.0
    %1097 = vmatpush1.msra.mxu0 0.0
    %1098 = vmatprep.subr.mxu0 0.0
    %1099 = vmatpush1.msra.mxu0 0.0
    %1100 = vmatprep.subr.mxu0 0.0
    %1101 = vmatpush1.msra.mxu0 0.0
    %1102 = vmatprep.subr.mxu0 0.0
    %1103 = vmatpush1.msra.mxu0 0.0
    %1104 = vmatprep.subr.mxu0 0.0
    %1105 = vmatpush1.msra.mxu0 0.0
    %1106 = vmatprep.subr.mxu0 0.0
    %1107 = vmatpush1.msra.mxu0 0.0
    %1108 = vmatprep.subr.mxu0 0.0
    %1109 = vmatpush1.msra.mxu0 0.0
    %1110 = vmatprep.subr.mxu0 0.0
    %1111 = vmatpush1.msra.mxu0 0.0
    %1112 = vmatprep.mubr.f32.mxu0 0.0
    %1113 = vmatmul.mubr.f32.gmra.mrb[0].mxu0 %v1046
    %v1114 = vpop.f32.mrb[0].mxu0
    %v1115 = vadd.f32 %v1043, %v1114
    %v1116 = vpop.f32.mrb[0].mxu0
    %1117 = vdwg.mxu0
    %v1118 = vxor.u32 %v1115, 2147483648
    %v1119 = vmul.f32 %v1118, 1.442695
    %v1120 = vpow.pop %v1119
    %v1121 = vadd.f32 %v1120, 1.0
    %v1122 = vrcp.pop %v1121
    %v1123 = vmul.f32 1.0, %v1122
    %v1124 = vtanh.pop %v1115
    %v1125 = vmul.f32 %v1123, %v585
    %1127 = vrot.lane.b32.xlu0 %v1124, 64
    %v1128 = vpop.permute.xlu0 %1127
    %v1130 = vmul.f32 %v1123, %v1128
    %1132 = vrot.lane.b32.xlu0 %v1130, 32
    %v1133 = vpop.permute.xlu0 %1132
    %v1135 = vadd.f32 %v1125, %v1133
    %v1136 = vtanh.pop %v1135
    %1138 = vrot.lane.b32.xlu0 %v1136, 64
    %v1139 = vpop.permute.xlu0 %1138
    %v1141 = vmul.f32 %v1123, %v1139
    %v1142 = vrot.slane %v880, 7
    %v1143 = vsel %vm473, %v1142, %v879
    %s1145 = scalar_lea.vmem [#allocation6], 2
    %1146 = vst.msk [vmem:[%s1145] sm:$0x3] %vm595, %v1143
    %1148 = vrot.lane.b32.xlu0 %v1141, 32
    %v1149 = vpop.permute.xlu0 %1148
    %vm1151 = vcmask 254976
    %1152 = vst.msk [vmem:[#allocation2] sm:$0x3] %vm1151, %v1149
    %1154 = vrot.lane.b32.xlu0 %v1135, 96
    %v1155 = vpop.permute.xlu0 %1154
    %1157 = vst.msk [vmem:[#allocation4] sm:$0x3] %vm1151, %v1155
    // Predicated region
    $region30: #{lstm_attn_decoder.1} parent=1 // pred_check
      _
    $region31: #{lstm_attn_decoder.1} parent=1 // pred_check_branch
      %1159 = sbr.rel (0) target = $region33
    $region32: #{lstm_attn_decoder.1} parent=1 // pred_region
      %s1161 = ssub.s32 32, 32
      %1162 = vsyncadd [#allocation3], %s1161
      %s1164 = sshll.u32 [#allocation2], 4
      %s1165 = int_to_ptr.vmem [resolvable:$true] %s1164
      %1167 = dma.vmem_to_hbm [thread:$0]  %s1165, 32, %s7, [#allocation3]
    $region33: #{lstm_attn_decoder.1} parent=1 // pred_fallthru
      _
    // Predicated region
    $region34: #{lstm_attn_decoder.1} parent=1 // pred_check
      _
    $region35: #{lstm_attn_decoder.1} parent=1 // pred_check_branch
      %1169 = sbr.rel (0) target = $region37
    $region36: #{lstm_attn_decoder.1} parent=1 // pred_region
      %s1171 = ssub.s32 32, 32
      %1172 = vsyncadd [#allocation5], %s1171
      %s1174 = sshll.u32 [#allocation4], 4
      %s1175 = int_to_ptr.vmem [resolvable:$true] %s1174
      %1177 = dma.vmem_to_hbm [thread:$0]  %s1175, 32, %s8, [#allocation5]
    $region37: #{lstm_attn_decoder.1} parent=1 // pred_fallthru
      _
    // Predicated region
    $region38: #{lstm_attn_decoder.1} parent=1 // pred_check
      _
    $region39: #{lstm_attn_decoder.1} parent=1 // pred_check_branch
      %1179 = sbr.rel (0) target = $region41
    $region40: #{lstm_attn_decoder.1} parent=1 // pred_region
      %s1181 = ssub.s32 64, 64
      %1182 = vsyncadd [#allocation5], %s1181
      %s1183 = sshll.u32 [#allocation6], 4
      %s1184 = int_to_ptr.vmem [resolvable:$true] %s1183
      %1189 = dma.vmem_to_hbm [thread:$0]  %s1184, 64, %s9, [#allocation5], 32, 32, 2
    $region41: #{lstm_attn_decoder.1} parent=1 // pred_fallthru
      _
    // Predicated region
    $region42: #{lstm_attn_decoder.1} parent=1 // pred_check
      _
    $region43: #{lstm_attn_decoder.1} parent=1 // pred_check_branch
      %1191 = sbr.rel (0) target = $region45
    $region44: #{lstm_attn_decoder.1} parent=1 // pred_region
      %1192 = dma.done [#allocation3], 32
    $region45: #{lstm_attn_decoder.1} parent=1 // pred_fallthru
      _
    // Predicated region
    $region46: #{lstm_attn_decoder.1} parent=1 // pred_check
      _
    $region47: #{lstm_attn_decoder.1} parent=1 // pred_check_branch
      %1194 = sbr.rel (0) target = $region49
    $region48: #{lstm_attn_decoder.1} parent=1 // pred_region
      %1195 = dma.done [#allocation5], 32
    $region49: #{lstm_attn_decoder.1} parent=1 // pred_fallthru
      _
    // Predicated region
    $region50: #{lstm_attn_decoder.1} parent=1 // pred_check
      _
    $region51: #{lstm_attn_decoder.1} parent=1 // pred_check_branch
      %1197 = sbr.rel (0) target = $region53
    $region52: #{lstm_attn_decoder.1} parent=1 // pred_region
      %1198 = dma.done [#allocation5], 64
    $region53: #{lstm_attn_decoder.1} parent=1 // pred_fallthru
      _
    %1199 = vsyncpa [#allocation3], 1
    %1200 = vsyncpa [#allocation5], 1

</llo_original>
